<compile_context>
chip_gen: v7x
topology: tpu7x:2x2x1
jax: 0.10.0
libtpu: 0.0.40
codegen_flags: <defaults>
</compile_context>

<pallas_src>
import functools

import jax
import jax.numpy as jnp
from jax.experimental import pallas as pl
from jax.experimental.pallas import tpu as pltpu


def _round_up(a: int, b: int) -> int:
    return ((a + b - 1) // b) * b


def _exgru_cell_kernel(x_ref, h_ref, wx_ref, wh_ref, bx_ref, bhn_ref,
                       wf_ref, bf_ref, out_ref, hnew_ref,
                       *, hp, h_valid, n_sub, sub_m):
    """Fused GRU cell + output projection for one batch tile.

    x_ref:    (tm, I)     bf16  input tile
    h_ref:    (tm, Hp)    f32   previous hidden state (lane-padded to Hp)
    wx_ref:   (I, 3*Hp)   bf16  [W_r | W_z | W_n]   (gates 128-lane aligned)
    wh_ref:   (Hp, 3*Hp)  bf16  [R_r | R_z | R_n]
    bx_ref:   (1, 3*Hp)   f32   [b_r+c_r | b_z+c_z | b_n]  (folded at pack time)
    bhn_ref:  (1, Hp)     f32   c_n (hidden bias of the "new" gate only)
    wf_ref:   (Hp, Op)    bf16  fc weight (zero padded)
    bf_ref:   (1, Op)     f32
    out_ref:  (tm, Op)    f32
    hnew_ref: (tm, Hp)    f32
    """
    # Grid-invariant operands, read once per grid step.
    wx = wx_ref[...]
    wh = wh_ref[...]
    wf = wf_ref[...]
    bx = bx_ref[...]
    bhn = bhn_ref[...]
    bf = bf_ref[...]

    if h_valid < hp:
        lane = jax.lax.broadcasted_iota(jnp.int32, (sub_m, hp), 1)
        pad_mask = lane < h_valid
    else:
        pad_mask = None

    # Statically-unrolled sub-tiles: sub-tile s+1's MXU gate matmuls can be
    # scheduled under sub-tile s's EUP (sigmoid/tanh) work and fc matmul.
    for s in range(n_sub):
        rows = pl.ds(s * sub_m, sub_m)
        x = x_ref[rows, :]
        h = h_ref[rows, :]

        gx = jnp.dot(x, wx, preferred_element_type=jnp.float32) + bx
        gh = jnp.dot(h.astype(wh.dtype), wh, preferred_element_type=jnp.float32)

        # Lane-aligned 128-wide gate slices: [reset | update | new].
        r = jax.nn.sigmoid(gx[:, 0 * hp:1 * hp] + gh[:, 0 * hp:1 * hp])
        z = jax.nn.sigmoid(gx[:, 1 * hp:2 * hp] + gh[:, 1 * hp:2 * hp])
        n = jnp.tanh(gx[:, 2 * hp:3 * hp] + r * (gh[:, 2 * hp:3 * hp] + bhn))

        h_new = (1.0 - z) * n + z * h
        if pad_mask is not None:
            # Keep pad lanes exactly zero so downstream use never has to rely
            # on the weight-pad rows being zero.
            h_new = jnp.where(pad_mask, h_new, 0.0)
        hnew_ref[rows, :] = h_new

        out = jnp.dot(h_new.astype(wf.dtype), wf,
                      preferred_element_type=jnp.float32) + bf
        out_ref[rows, :] = out


def init_exgru_params(key, input_size, hidden_size, output_size):
    """Unpadded float32 parameters stored (in, out) so forward is x @ W + b
    (same math as the PyTorch nn.Linear layers)."""
    def linear(k, fan_in, fan_out):
        kw, kb = jax.random.split(k)
        std = (2.0 / (fan_in + fan_out)) ** 0.5
        w = std * jax.random.normal(kw, (fan_in, fan_out), dtype=jnp.float32)
        b = 0.1 * jax.random.normal(kb, (fan_out,), dtype=jnp.float32)
        return w, b

    keys = jax.random.split(key, 7)
    p = {}
    p["w1"], p["b1"] = linear(keys[0], input_size, hidden_size)   # reset, x
    p["r1"], p["c1"] = linear(keys[1], hidden_size, hidden_size)  # reset, h
    p["w2"], p["b2"] = linear(keys[2], input_size, hidden_size)   # update, x
    p["r2"], p["c2"] = linear(keys[3], hidden_size, hidden_size)  # update, h
    p["w3"], p["b3"] = linear(keys[4], input_size, hidden_size)   # new, x
    p["r3"], p["c3"] = linear(keys[5], hidden_size, hidden_size)  # new, h
    p["wf"], p["bf"] = linear(keys[6], hidden_size, output_size)  # fc
    return p


def pack_exgru_params(p, *, compute_dtype=jnp.bfloat16):
    """Pad every gate to a 128-lane boundary, fuse the three gate projections
    into single (K, 3*Hp) weights, and fold the reset/update biases."""
    input_size, hidden_size = p["w1"].shape
    output_size = p["wf"].shape[1]
    Hp = _round_up(hidden_size, 128)
    Op = _round_up(output_size, 128)

    def pad_w(w, rows, cols):
        out = jnp.zeros((rows, cols), jnp.float32)
        return out.at[: w.shape[0], : w.shape[1]].set(w)

    def pad_b(b, cols):
        out = jnp.zeros((cols,), jnp.float32)
        return out.at[: b.shape[0]].set(b)

    wx = jnp.concatenate(
        [pad_w(p["w1"], input_size, Hp),
         pad_w(p["w2"], input_size, Hp),
         pad_w(p["w3"], input_size, Hp)], axis=1)
    wh = jnp.concatenate(
        [pad_w(p["r1"], Hp, Hp),
         pad_w(p["r2"], Hp, Hp),
         pad_w(p["r3"], Hp, Hp)], axis=1)
    # reset/update: sigmoid(xW + hR + (b + c)) -> fold both biases into the
    # x-side bias (removes a (tm, 2*Hp) VPU add per grid step).  The "new"
    # gate's hidden bias c3 must stay separate: tanh(xW3 + b3 + r*(hR3 + c3)).
    bx = jnp.concatenate(
        [pad_b(p["b1"] + p["c1"], Hp),
         pad_b(p["b2"] + p["c2"], Hp),
         pad_b(p["b3"], Hp)]).reshape(1, 3 * Hp)
    bhn = pad_b(p["c3"], Hp).reshape(1, Hp)
    wf = pad_w(p["wf"], Hp, Op)
    bf = pad_b(p["bf"], Op).reshape(1, Op)

    return {
        "wx": wx.astype(compute_dtype),
        "wh": wh.astype(compute_dtype),
        "wf": wf.astype(compute_dtype),
        "bx": bx, "bhn": bhn, "bf": bf,
        "hidden_size": hidden_size,
        "output_size": output_size,
        "Hp": Hp, "Op": Op,
        "compute_dtype": compute_dtype,
    }


def exgru_forward(packed, x, hidden_state, *, tm=256):
    """Pallas equivalent of ExGRU.forward(x, hidden_state) -> (output, h_new)."""
    B, I = x.shape
    H = packed["hidden_size"]
    O = packed["output_size"]
    Hp, Op = packed["Hp"], packed["Op"]
    dt = packed["compute_dtype"]

    # ---------------- batch tiling (16-row granularity for bf16 tiles) ------
    tm = _round_up(max(16, min(tm, 512)), 16)
    B_pad = _round_up(max(B, 1), 16)
    if B_pad >= 32:
        # v7x megacore: keep >= 2 "parallel" grid steps so both TensorCores
        # get work; essentially free on v5e/v6e (per-step overhead ~0.35us).
        half = max(16, (B_pad // 2) // 16 * 16)
        tm = min(tm, half)
    tm = min(tm, B_pad)

    # ---------------- explicit VMEM budget ----------------------------------
    def footprint(tile_m):
        w_bytes = (I * 3 * Hp + Hp * 3 * Hp + Hp * Op) * 2          # bf16, single-buffered
        b_bytes = (3 * Hp + Hp + Op) * 4
        io_bytes = 2 * tile_m * (I * 2 + Hp * 4)                    # x, h inputs (2 bufs)
        io_bytes += 2 * tile_m * (Op * 4 + Hp * 4)                  # out, h_new outputs
        scratch = 3 * tile_m * 3 * Hp * 4                           # gx/gh/gate temporaries
        return w_bytes + b_bytes + io_bytes + scratch

    budget = 40 * 1024 * 1024          # leaves headroom even on v7x (64 MiB physical)
    while footprint(tm) > budget and tm > 16:
        tm = max(16, _round_up(tm // 2, 16))
    B_pad = _round_up(B_pad, tm)
    grid = (B_pad // tm,)
    vmem_limit = int(min(max(footprint(tm) * 3 // 2 + (4 << 20), 32 << 20),
                         48 << 20))

    n_sub = 2 if (tm >= 32 and tm % 32 == 0) else 1
    sub_m = tm // n_sub

    # ---------------- pad inputs only when needed ---------------------------
    if B == B_pad:
        x_pad = x.astype(dt)
    else:
        x_pad = jnp.zeros((B_pad, I), dt).at[:B, :].set(x.astype(dt))
    h_fresh = not (B == B_pad and H == Hp)
    if h_fresh:
        h_pad = jnp.zeros((B_pad, Hp), jnp.float32).at[:B, :H].set(hidden_state)
    else:
        h_pad = hidden_state

    kernel = functools.partial(_exgru_cell_kernel, hp=Hp, h_valid=H,
                               n_sub=n_sub, sub_m=sub_m)

    def _run(single_buffer_weights):
        # Grid-invariant weights/biases: single-buffer to halve their VMEM
        # footprint (they are never re-DMA'd since their block index is const).
        wkw = ({"pipeline_mode": pl.Buffered(1)}
               if single_buffer_weights else {})
        grid_spec = pltpu.PrefetchScalarGridSpec(
            num_scalar_prefetch=0,
            grid=grid,
            in_specs=[
                pl.BlockSpec((tm, I), lambda i: (i, 0)),              # x tile
                pl.BlockSpec((tm, Hp), lambda i: (i, 0)),             # h tile
                pl.BlockSpec((I, 3 * Hp), lambda i: (0, 0), **wkw),   # wx
                pl.BlockSpec((Hp, 3 * Hp), lambda i: (0, 0), **wkw),  # wh
                pl.BlockSpec((1, 3 * Hp), lambda i: (0, 0), **wkw),   # bx (folded)
                pl.BlockSpec((1, Hp), lambda i: (0, 0), **wkw),       # c_n
                pl.BlockSpec((Hp, Op), lambda i: (0, 0), **wkw),      # wf
                pl.BlockSpec((1, Op), lambda i: (0, 0), **wkw),       # bf
            ],
            out_specs=(
                pl.BlockSpec((tm, Op), lambda i: (i, 0)),
                pl.BlockSpec((tm, Hp), lambda i: (i, 0)),
            ),
        )
        return pl.pallas_call(
            kernel,
            out_shape=(
                jax.ShapeDtypeStruct((B_pad, Op), jnp.float32),
                jax.ShapeDtypeStruct((B_pad, Hp), jnp.float32),
            ),
            grid_spec=grid_spec,
            # Donate the padded hidden state into h_new (same shape/dtype):
            # no fresh (B_pad, Hp) HBM buffer per step when driven recurrently.
            input_output_aliases=({1: 1} if h_fresh else {}),
            compiler_params=pltpu.CompilerParams(
                dimension_semantics=("parallel",),
                vmem_limit_bytes=vmem_limit,
            ),
        )(x_pad, h_pad, packed["wx"], packed["wh"], packed["bx"],
          packed["bhn"], packed["wf"], packed["bf"])

    try:
        out_pad, hnew_pad = _run(True)
    except Exception:
        # Fallback for jax builds that reject Buffered(1) on a BlockSpec.
        out_pad, hnew_pad = _run(False)

    out = out_pad if (B == B_pad and O == Op) else out_pad[:B, :O]
    h_new = hnew_pad if (B == B_pad and H == Hp) else hnew_pad[:B, :H]
    return out, h_new


def exgru_reference(p, x, h):
    """Plain-JAX f32 reference matching the PyTorch forward exactly."""
    r = jax.nn.sigmoid(x @ p["w1"] + p["b1"] + h @ p["r1"] + p["c1"])
    z = jax.nn.sigmoid(h @ p["r2"] + p["c2"] + x @ p["w2"] + p["b2"])
    n = jnp.tanh(x @ p["w3"] + p["b3"] + r * (h @ p["r3"] + p["c3"]))
    h_new = (1.0 - z) * n + z * h
    out = h_new @ p["wf"] + p["bf"]
    return out, h_new


if __name__ == "__main__":
    key = jax.random.PRNGKey(0)
    k_p, k_x, k_h, k_x2, k_h2 = jax.random.split(key, 5)

    batch, input_size, hidden_size, output_size = 4, 32, 64, 2

    params = init_exgru_params(k_p, input_size, hidden_size, output_size)
    packed = pack_exgru_params(params, compute_dtype=jnp.bfloat16)

    # --- small batch (single grid step) -------------------------------------
    x = jax.random.normal(k_x, (batch, input_size), dtype=jnp.float32)
    h0 = jax.random.normal(k_h, (batch, hidden_size), dtype=jnp.float32)

    out, h_new = exgru_forward(packed, x, h0)
    out = jax.block_until_ready(out)
    h_new = jax.block_until_ready(h_new)

    out_ref, hnew_ref = exgru_reference(params, x, h0)
    assert out.shape == (batch, output_size)
    assert h_new.shape == (batch, hidden_size)
    # bf16 matmul operands with f32 accumulation -> modest tolerance vs f32.
    assert jnp.allclose(h_new, hnew_ref, atol=3e-2, rtol=3e-2), (
        float(jnp.max(jnp.abs(h_new - hnew_ref))))
    assert jnp.allclose(out, out_ref, atol=3e-2, rtol=3e-2), (
        float(jnp.max(jnp.abs(out - out_ref))))

    # --- larger ragged batch (multiple grid steps + in-body sub-tiling) -----
    batch2 = 80
    x2 = jax.random.normal(k_x2, (batch2, input_size), dtype=jnp.float32)
    h02 = jax.random.normal(k_h2, (batch2, hidden_size), dtype=jnp.float32)

    out2, h_new2 = exgru_forward(packed, x2, h02)
    out2 = jax.block_until_ready(out2)
    h_new2 = jax.block_until_ready(h_new2)

    out2_ref, hnew2_ref = exgru_reference(params, x2, h02)
    assert out2.shape == (batch2, output_size)
    assert h_new2.shape == (batch2, hidden_size)
    assert jnp.allclose(h_new2, hnew2_ref, atol=3e-2, rtol=3e-2), (
        float(jnp.max(jnp.abs(h_new2 - hnew2_ref))))
    assert jnp.allclose(out2, out2_ref, atol=3e-2, rtol=3e-2), (
        float(jnp.max(jnp.abs(out2 - out2_ref))))

    print("KERNEL_OK")
</pallas_src>

<mosaic_0001>
module attributes {stable_mosaic.version = 11 : i64} {
  func.func @_exgru_cell_kernel(%arg0: i32, %arg1: memref<16x32xbf16, #tpu.memory_space<vmem>>, %arg2: memref<16x128xf32, #tpu.memory_space<vmem>>, %arg3: memref<32x384xbf16, #tpu.memory_space<vmem>>, %arg4: memref<128x384xbf16, #tpu.memory_space<vmem>>, %arg5: memref<1x384xf32, #tpu.memory_space<vmem>>, %arg6: memref<1x128xf32, #tpu.memory_space<vmem>>, %arg7: memref<128x128xbf16, #tpu.memory_space<vmem>>, %arg8: memref<1x128xf32, #tpu.memory_space<vmem>>, %arg9: memref<16x128xf32, #tpu.memory_space<vmem>>, %arg10: memref<16x128xf32, #tpu.memory_space<vmem>>) attributes {dimension_semantics = [#tpu.dimension_semantics<parallel>], iteration_bounds = array<i64: 1>, scalar_prefetch = 0 : i64, scratch_operands = 0 : i64, tpu.core_type = #tpu.core_type<tc>, window_params = [{transform_indices = @transform_0, window_bounds = array<i64: 16, 32>}, {transform_indices = @transform_1, window_bounds = array<i64: 16, 128>}, {pipeline_mode = #tpu.pipeline_mode<synchronous>, transform_indices = @transform_2, window_bounds = array<i64: 32, 384>}, {pipeline_mode = #tpu.pipeline_mode<synchronous>, transform_indices = @transform_3, window_bounds = array<i64: 128, 384>}, {pipeline_mode = #tpu.pipeline_mode<synchronous>, transform_indices = @transform_4, window_bounds = array<i64: 1, 384>}, {pipeline_mode = #tpu.pipeline_mode<synchronous>, transform_indices = @transform_5, window_bounds = array<i64: 1, 128>}, {pipeline_mode = #tpu.pipeline_mode<synchronous>, transform_indices = @transform_6, window_bounds = array<i64: 128, 128>}, {pipeline_mode = #tpu.pipeline_mode<synchronous>, transform_indices = @transform_7, window_bounds = array<i64: 1, 128>}, {transform_indices = @transform_8, window_bounds = array<i64: 16, 128>}, {transform_indices = @transform_9, window_bounds = array<i64: 16, 128>}]} {
    %c0 = arith.constant 0 : index
    %c0_0 = arith.constant 0 : index
    %0 = vector.load %arg3[%c0, %c0_0] : memref<32x384xbf16, #tpu.memory_space<vmem>>, vector<32x384xbf16>
    %c0_1 = arith.constant 0 : index
    %c0_2 = arith.constant 0 : index
    %1 = vector.load %arg4[%c0_1, %c0_2] : memref<128x384xbf16, #tpu.memory_space<vmem>>, vector<128x384xbf16>
    %c0_3 = arith.constant 0 : index
    %c0_4 = arith.constant 0 : index
    %2 = vector.load %arg7[%c0_3, %c0_4] : memref<128x128xbf16, #tpu.memory_space<vmem>>, vector<128x128xbf16>
    %c0_5 = arith.constant 0 : index
    %c0_6 = arith.constant 0 : index
    %3 = vector.load %arg5[%c0_5, %c0_6] : memref<1x384xf32, #tpu.memory_space<vmem>>, vector<1x384xf32>
    %c0_7 = arith.constant 0 : index
    %c0_8 = arith.constant 0 : index
    %4 = vector.load %arg6[%c0_7, %c0_8] : memref<1x128xf32, #tpu.memory_space<vmem>>, vector<1x128xf32>
    %c0_9 = arith.constant 0 : index
    %c0_10 = arith.constant 0 : index
    %5 = vector.load %arg8[%c0_9, %c0_10] : memref<1x128xf32, #tpu.memory_space<vmem>>, vector<1x128xf32>
    %6 = tpu.iota {dimensions = array<i32: 1>} : vector<16x128xi32>
    %c64_i32 = arith.constant 64 : i32
    %7 = vector.broadcast %c64_i32 : i32 to vector<16x128xi32>
    %8 = arith.cmpi slt, %6, %7 : vector<16x128xi32>
    %c0_11 = arith.constant 0 : index
    %c0_12 = arith.constant 0 : index
    %9 = vector.load %arg1[%c0_11, %c0_12] : memref<16x32xbf16, #tpu.memory_space<vmem>>, vector<16x32xbf16>
    %c0_13 = arith.constant 0 : index
    %c0_14 = arith.constant 0 : index
    %10 = vector.load %arg2[%c0_13, %c0_14] : memref<16x128xf32, #tpu.memory_space<vmem>>, vector<16x128xf32>
    %cst = arith.constant dense<0.000000e+00> : vector<16x384xf32>
    %11 = tpu.matmul %9, %0, %cst {dimension_numbers = #tpu.dot_dimension_numbers<[1], [0], [0], [1], [0, 0, 1, 1], [], []>} : vector<16x32xbf16>, vector<32x384xbf16>, vector<16x384xf32> -> vector<16x384xf32>
    %12 = vector.broadcast %3 : vector<1x384xf32> to vector<16x384xf32>
    %13 = arith.addf %11, %12 : vector<16x384xf32>
    %14 = arith.truncf %10 : vector<16x128xf32> to vector<16x128xbf16>
    %cst_15 = arith.constant dense<0.000000e+00> : vector<16x384xf32>
    %15 = tpu.matmul %14, %1, %cst_15 {dimension_numbers = #tpu.dot_dimension_numbers<[1], [0], [0], [1], [0, 0, 1, 1], [], []>} : vector<16x128xbf16>, vector<128x384xbf16>, vector<16x384xf32> -> vector<16x384xf32>
    %16 = vector.extract_strided_slice %13 {offsets = [0, 0], sizes = [16, 128], strides = [1, 1]} : vector<16x384xf32> to vector<16x128xf32>
    %17 = vector.extract_strided_slice %15 {offsets = [0, 0], sizes = [16, 128], strides = [1, 1]} : vector<16x384xf32> to vector<16x128xf32>
    %18 = arith.addf %16, %17 : vector<16x128xf32>
    %19 = arith.negf %18 : vector<16x128xf32>
    %20 = math.exp %19 : vector<16x128xf32>
    %cst_16 = arith.constant 1.000000e+00 : f32
    %21 = vector.broadcast %cst_16 : f32 to vector<16x128xf32>
    %22 = arith.addf %21, %20 : vector<16x128xf32>
    %23 = arith.divf %21, %22 : vector<16x128xf32>
    %24 = vector.extract_strided_slice %13 {offsets = [0, 128], sizes = [16, 128], strides = [1, 1]} : vector<16x384xf32> to vector<16x128xf32>
    %25 = vector.extract_strided_slice %15 {offsets = [0, 128], sizes = [16, 128], strides = [1, 1]} : vector<16x384xf32> to vector<16x128xf32>
    %26 = arith.addf %24, %25 : vector<16x128xf32>
    %27 = arith.negf %26 : vector<16x128xf32>
    %28 = math.exp %27 : vector<16x128xf32>
    %cst_17 = arith.constant 1.000000e+00 : f32
    %29 = vector.broadcast %cst_17 : f32 to vector<16x128xf32>
    %30 = arith.addf %29, %28 : vector<16x128xf32>
    %31 = arith.divf %29, %30 : vector<16x128xf32>
    %32 = vector.extract_strided_slice %13 {offsets = [0, 256], sizes = [16, 128], strides = [1, 1]} : vector<16x384xf32> to vector<16x128xf32>
    %33 = vector.extract_strided_slice %15 {offsets = [0, 256], sizes = [16, 128], strides = [1, 1]} : vector<16x384xf32> to vector<16x128xf32>
    %34 = vector.broadcast %4 : vector<1x128xf32> to vector<16x128xf32>
    %35 = arith.addf %33, %34 : vector<16x128xf32>
    %36 = arith.mulf %23, %35 : vector<16x128xf32>
    %37 = arith.addf %32, %36 : vector<16x128xf32>
    %38 = math.tanh %37 : vector<16x128xf32>
    %cst_18 = arith.constant 1.000000e+00 : f32
    %39 = vector.broadcast %cst_18 : f32 to vector<16x128xf32>
    %40 = arith.subf %39, %31 : vector<16x128xf32>
    %41 = arith.mulf %40, %38 : vector<16x128xf32>
    %42 = arith.mulf %31, %10 : vector<16x128xf32>
    %43 = arith.addf %41, %42 : vector<16x128xf32>
    %cst_19 = arith.constant 0.000000e+00 : f32
    %44 = vector.broadcast %cst_19 : f32 to vector<16x128xf32>
    %45 = arith.select %8, %43, %44 : vector<16x128xi1>, vector<16x128xf32>
    %c0_20 = arith.constant 0 : index
    %c0_21 = arith.constant 0 : index
    %46 = vector.load %arg10[%c0_20, %c0_21] : memref<16x128xf32, #tpu.memory_space<vmem>>, vector<16x128xf32>
    tpu.vector_store %arg10[%c0_20, %c0_21], %45 {strides = array<i32>} : memref<16x128xf32, #tpu.memory_space<vmem>>, vector<16x128xf32>,
    %47 = arith.truncf %45 : vector<16x128xf32> to vector<16x128xbf16>
    %cst_22 = arith.constant dense<0.000000e+00> : vector<16x128xf32>
    %48 = tpu.matmul %47, %2, %cst_22 {dimension_numbers = #tpu.dot_dimension_numbers<[1], [0], [0], [1], [0, 0, 1, 1], [], []>} : vector<16x128xbf16>, vector<128x128xbf16>, vector<16x128xf32> -> vector<16x128xf32>
    %49 = vector.broadcast %5 : vector<1x128xf32> to vector<16x128xf32>
    %50 = arith.addf %48, %49 : vector<16x128xf32>
    %c0_23 = arith.constant 0 : index
    %c0_24 = arith.constant 0 : index
    %51 = vector.load %arg9[%c0_23, %c0_24] : memref<16x128xf32, #tpu.memory_space<vmem>>, vector<16x128xf32>
    tpu.vector_store %arg9[%c0_23, %c0_24], %50 {strides = array<i32>} : memref<16x128xf32, #tpu.memory_space<vmem>>, vector<16x128xf32>,
    return
  }
  func.func @transform_0(%arg0: i32) -> (i32, i32) {
    %c0_i32 = arith.constant 0 : i32
    %c0_i32_0 = arith.constant 0 : i32
    return %arg0, %c0_i32 : i32, i32
  }
  func.func @transform_1(%arg0: i32) -> (i32, i32) {
    %c0_i32 = arith.constant 0 : i32
    %c0_i32_0 = arith.constant 0 : i32
    return %arg0, %c0_i32 : i32, i32
  }
  func.func @transform_2(%arg0: i32) -> (i32, i32) {
    %c0_i32 = arith.constant 0 : i32
    %c0_i32_0 = arith.constant 0 : i32
    %c0_i32_1 = arith.constant 0 : i32
    return %c0_i32, %c0_i32_0 : i32, i32
  }
  func.func @transform_3(%arg0: i32) -> (i32, i32) {
    %c0_i32 = arith.constant 0 : i32
    %c0_i32_0 = arith.constant 0 : i32
    %c0_i32_1 = arith.constant 0 : i32
    return %c0_i32, %c0_i32_0 : i32, i32
  }
  func.func @transform_4(%arg0: i32) -> (i32, i32) {
    %c0_i32 = arith.constant 0 : i32
    %c0_i32_0 = arith.constant 0 : i32
    %c0_i32_1 = arith.constant 0 : i32
    return %c0_i32, %c0_i32_0 : i32, i32
  }
  func.func @transform_5(%arg0: i32) -> (i32, i32) {
    %c0_i32 = arith.constant 0 : i32
    %c0_i32_0 = arith.constant 0 : i32
    %c0_i32_1 = arith.constant 0 : i32
    return %c0_i32, %c0_i32_0 : i32, i32
  }
  func.func @transform_6(%arg0: i32) -> (i32, i32) {
    %c0_i32 = arith.constant 0 : i32
    %c0_i32_0 = arith.constant 0 : i32
    %c0_i32_1 = arith.constant 0 : i32
    return %c0_i32, %c0_i32_0 : i32, i32
  }
  func.func @transform_7(%arg0: i32) -> (i32, i32) {
    %c0_i32 = arith.constant 0 : i32
    %c0_i32_0 = arith.constant 0 : i32
    %c0_i32_1 = arith.constant 0 : i32
    return %c0_i32, %c0_i32_0 : i32, i32
  }
  func.func @transform_8(%arg0: i32) -> (i32, i32) {
    %c0_i32 = arith.constant 0 : i32
    %c0_i32_0 = arith.constant 0 : i32
    return %arg0, %c0_i32 : i32, i32
  }
  func.func @transform_9(%arg0: i32) -> (i32, i32) {
    %c0_i32 = arith.constant 0 : i32
    %c0_i32_0 = arith.constant 0 : i32
    return %arg0, %c0_i32 : i32, i32
  }
}

module attributes {stable_mosaic.version = 11 : i64} {
  func.func @_exgru_cell_kernel(%arg0: i32, %arg1: memref<16x32xbf16, #tpu.memory_space<vmem>>, %arg2: memref<16x128xf32, #tpu.memory_space<vmem>>, %arg3: memref<32x384xbf16, #tpu.memory_space<vmem>>, %arg4: memref<128x384xbf16, #tpu.memory_space<vmem>>, %arg5: memref<1x384xf32, #tpu.memory_space<vmem>>, %arg6: memref<1x128xf32, #tpu.memory_space<vmem>>, %arg7: memref<128x128xbf16, #tpu.memory_space<vmem>>, %arg8: memref<1x128xf32, #tpu.memory_space<vmem>>, %arg9: memref<16x128xf32, #tpu.memory_space<vmem>>, %arg10: memref<16x128xf32, #tpu.memory_space<vmem>>) attributes {dimension_semantics = [#tpu.dimension_semantics<parallel>], iteration_bounds = array<i64: 1>, scalar_prefetch = 0 : i64, scratch_operands = 0 : i64, tpu.core_type = #tpu.core_type<tc>, window_params = [{transform_indices = @transform_0, window_bounds = array<i64: 16, 32>}, {transform_indices = @transform_1, window_bounds = array<i64: 16, 128>}, {pipeline_mode = #tpu.pipeline_mode<synchronous>, transform_indices = @transform_2, window_bounds = array<i64: 32, 384>}, {pipeline_mode = #tpu.pipeline_mode<synchronous>, transform_indices = @transform_3, window_bounds = array<i64: 128, 384>}, {pipeline_mode = #tpu.pipeline_mode<synchronous>, transform_indices = @transform_4, window_bounds = array<i64: 1, 384>}, {pipeline_mode = #tpu.pipeline_mode<synchronous>, transform_indices = @transform_5, window_bounds = array<i64: 1, 128>}, {pipeline_mode = #tpu.pipeline_mode<synchronous>, transform_indices = @transform_6, window_bounds = array<i64: 128, 128>}, {pipeline_mode = #tpu.pipeline_mode<synchronous>, transform_indices = @transform_7, window_bounds = array<i64: 1, 128>}, {transform_indices = @transform_8, window_bounds = array<i64: 16, 128>}, {transform_indices = @transform_9, window_bounds = array<i64: 16, 128>}]} {
    %c0 = arith.constant 0 : index
    %c0_0 = arith.constant 0 : index
    %0 = vector.load %arg3[%c0, %c0_0] : memref<32x384xbf16, #tpu.memory_space<vmem>>, vector<32x384xbf16>
    %c0_1 = arith.constant 0 : index
    %c0_2 = arith.constant 0 : index
    %1 = vector.load %arg4[%c0_1, %c0_2] : memref<128x384xbf16, #tpu.memory_space<vmem>>, vector<128x384xbf16>
    %c0_3 = arith.constant 0 : index
    %c0_4 = arith.constant 0 : index
    %2 = vector.load %arg7[%c0_3, %c0_4] : memref<128x128xbf16, #tpu.memory_space<vmem>>, vector<128x128xbf16>
    %c0_5 = arith.constant 0 : index
    %c0_6 = arith.constant 0 : index
    %3 = vector.load %arg5[%c0_5, %c0_6] : memref<1x384xf32, #tpu.memory_space<vmem>>, vector<1x384xf32>
    %c0_7 = arith.constant 0 : index
    %c0_8 = arith.constant 0 : index
    %4 = vector.load %arg6[%c0_7, %c0_8] : memref<1x128xf32, #tpu.memory_space<vmem>>, vector<1x128xf32>
    %c0_9 = arith.constant 0 : index
    %c0_10 = arith.constant 0 : index
    %5 = vector.load %arg8[%c0_9, %c0_10] : memref<1x128xf32, #tpu.memory_space<vmem>>, vector<1x128xf32>
    %6 = tpu.iota {dimensions = array<i32: 1>} : vector<16x128xi32>
    %c64_i32 = arith.constant 64 : i32
    %7 = vector.broadcast %c64_i32 : i32 to vector<16x128xi32>
    %8 = arith.cmpi slt, %6, %7 : vector<16x128xi32>
    %c0_11 = arith.constant 0 : index
    %c0_12 = arith.constant 0 : index
    %9 = vector.load %arg1[%c0_11, %c0_12] : memref<16x32xbf16, #tpu.memory_space<vmem>>, vector<16x32xbf16>
    %c0_13 = arith.constant 0 : index
    %c0_14 = arith.constant 0 : index
    %10 = vector.load %arg2[%c0_13, %c0_14] : memref<16x128xf32, #tpu.memory_space<vmem>>, vector<16x128xf32>
    %cst = arith.constant dense<0.000000e+00> : vector<16x384xf32>
    %11 = tpu.matmul %9, %0, %cst {dimension_numbers = #tpu.dot_dimension_numbers<[1], [0], [0], [1], [0, 0, 1, 1], [], []>} : vector<16x32xbf16>, vector<32x384xbf16>, vector<16x384xf32> -> vector<16x384xf32>
    %12 = vector.broadcast %3 : vector<1x384xf32> to vector<16x384xf32>
    %13 = arith.addf %11, %12 : vector<16x384xf32>
    %14 = arith.truncf %10 : vector<16x128xf32> to vector<16x128xbf16>
    %cst_15 = arith.constant dense<0.000000e+00> : vector<16x384xf32>
    %15 = tpu.matmul %14, %1, %cst_15 {dimension_numbers = #tpu.dot_dimension_numbers<[1], [0], [0], [1], [0, 0, 1, 1], [], []>} : vector<16x128xbf16>, vector<128x384xbf16>, vector<16x384xf32> -> vector<16x384xf32>
    %16 = vector.extract_strided_slice %13 {offsets = [0, 0], sizes = [16, 128], strides = [1, 1]} : vector<16x384xf32> to vector<16x128xf32>
    %17 = vector.extract_strided_slice %15 {offsets = [0, 0], sizes = [16, 128], strides = [1, 1]} : vector<16x384xf32> to vector<16x128xf32>
    %18 = arith.addf %16, %17 : vector<16x128xf32>
    %19 = arith.negf %18 : vector<16x128xf32>
    %20 = math.exp %19 : vector<16x128xf32>
    %cst_16 = arith.constant 1.000000e+00 : f32
    %21 = vector.broadcast %cst_16 : f32 to vector<16x128xf32>
    %22 = arith.addf %21, %20 : vector<16x128xf32>
    %23 = arith.divf %21, %22 : vector<16x128xf32>
    %24 = vector.extract_strided_slice %13 {offsets = [0, 128], sizes = [16, 128], strides = [1, 1]} : vector<16x384xf32> to vector<16x128xf32>
    %25 = vector.extract_strided_slice %15 {offsets = [0, 128], sizes = [16, 128], strides = [1, 1]} : vector<16x384xf32> to vector<16x128xf32>
    %26 = arith.addf %24, %25 : vector<16x128xf32>
    %27 = arith.negf %26 : vector<16x128xf32>
    %28 = math.exp %27 : vector<16x128xf32>
    %cst_17 = arith.constant 1.000000e+00 : f32
    %29 = vector.broadcast %cst_17 : f32 to vector<16x128xf32>
    %30 = arith.addf %29, %28 : vector<16x128xf32>
    %31 = arith.divf %29, %30 : vector<16x128xf32>
    %32 = vector.extract_strided_slice %13 {offsets = [0, 256], sizes = [16, 128], strides = [1, 1]} : vector<16x384xf32> to vector<16x128xf32>
    %33 = vector.extract_strided_slice %15 {offsets = [0, 256], sizes = [16, 128], strides = [1, 1]} : vector<16x384xf32> to vector<16x128xf32>
    %34 = vector.broadcast %4 : vector<1x128xf32> to vector<16x128xf32>
    %35 = arith.addf %33, %34 : vector<16x128xf32>
    %36 = arith.mulf %23, %35 : vector<16x128xf32>
    %37 = arith.addf %32, %36 : vector<16x128xf32>
    %38 = math.tanh %37 : vector<16x128xf32>
    %cst_18 = arith.constant 1.000000e+00 : f32
    %39 = vector.broadcast %cst_18 : f32 to vector<16x128xf32>
    %40 = arith.subf %39, %31 : vector<16x128xf32>
    %41 = arith.mulf %40, %38 : vector<16x128xf32>
    %42 = arith.mulf %31, %10 : vector<16x128xf32>
    %43 = arith.addf %41, %42 : vector<16x128xf32>
    %cst_19 = arith.constant 0.000000e+00 : f32
    %44 = vector.broadcast %cst_19 : f32 to vector<16x128xf32>
    %45 = arith.select %8, %43, %44 : vector<16x128xi1>, vector<16x128xf32>
    %c0_20 = arith.constant 0 : index
    %c0_21 = arith.constant 0 : index
    %46 = vector.load %arg10[%c0_20, %c0_21] : memref<16x128xf32, #tpu.memory_space<vmem>>, vector<16x128xf32>
    tpu.vector_store %arg10[%c0_20, %c0_21], %45 {strides = array<i32>} : memref<16x128xf32, #tpu.memory_space<vmem>>, vector<16x128xf32>,
    %47 = arith.truncf %45 : vector<16x128xf32> to vector<16x128xbf16>
    %cst_22 = arith.constant dense<0.000000e+00> : vector<16x128xf32>
    %48 = tpu.matmul %47, %2, %cst_22 {dimension_numbers = #tpu.dot_dimension_numbers<[1], [0], [0], [1], [0, 0, 1, 1], [], []>} : vector<16x128xbf16>, vector<128x128xbf16>, vector<16x128xf32> -> vector<16x128xf32>
    %49 = vector.broadcast %5 : vector<1x128xf32> to vector<16x128xf32>
    %50 = arith.addf %48, %49 : vector<16x128xf32>
    %c0_23 = arith.constant 0 : index
    %c0_24 = arith.constant 0 : index
    %51 = vector.load %arg9[%c0_23, %c0_24] : memref<16x128xf32, #tpu.memory_space<vmem>>, vector<16x128xf32>
    tpu.vector_store %arg9[%c0_23, %c0_24], %50 {strides = array<i32>} : memref<16x128xf32, #tpu.memory_space<vmem>>, vector<16x128xf32>,
    return
  }
  func.func @transform_0(%arg0: i32) -> (i32, i32) {
    %c0_i32 = arith.constant 0 : i32
    %c0_i32_0 = arith.constant 0 : i32
    return %arg0, %c0_i32 : i32, i32
  }
  func.func @transform_1(%arg0: i32) -> (i32, i32) {
    %c0_i32 = arith.constant 0 : i32
    %c0_i32_0 = arith.constant 0 : i32
    return %arg0, %c0_i32 : i32, i32
  }
  func.func @transform_2(%arg0: i32) -> (i32, i32) {
    %c0_i32 = arith.constant 0 : i32
    %c0_i32_0 = arith.constant 0 : i32
    %c0_i32_1 = arith.constant 0 : i32
    return %c0_i32, %c0_i32_0 : i32, i32
  }
  func.func @transform_3(%arg0: i32) -> (i32, i32) {
    %c0_i32 = arith.constant 0 : i32
    %c0_i32_0 = arith.constant 0 : i32
    %c0_i32_1 = arith.constant 0 : i32
    return %c0_i32, %c0_i32_0 : i32, i32
  }
  func.func @transform_4(%arg0: i32) -> (i32, i32) {
    %c0_i32 = arith.constant 0 : i32
    %c0_i32_0 = arith.constant 0 : i32
    %c0_i32_1 = arith.constant 0 : i32
    return %c0_i32, %c0_i32_0 : i32, i32
  }
  func.func @transform_5(%arg0: i32) -> (i32, i32) {
    %c0_i32 = arith.constant 0 : i32
    %c0_i32_0 = arith.constant 0 : i32
    %c0_i32_1 = arith.constant 0 : i32
    return %c0_i32, %c0_i32_0 : i32, i32
  }
  func.func @transform_6(%arg0: i32) -> (i32, i32) {
    %c0_i32 = arith.constant 0 : i32
    %c0_i32_0 = arith.constant 0 : i32
    %c0_i32_1 = arith.constant 0 : i32
    return %c0_i32, %c0_i32_0 : i32, i32
  }
  func.func @transform_7(%arg0: i32) -> (i32, i32) {
    %c0_i32 = arith.constant 0 : i32
    %c0_i32_0 = arith.constant 0 : i32
    %c0_i32_1 = arith.constant 0 : i32
    return %c0_i32, %c0_i32_0 : i32, i32
  }
  func.func @transform_8(%arg0: i32) -> (i32, i32) {
    %c0_i32 = arith.constant 0 : i32
    %c0_i32_0 = arith.constant 0 : i32
    return %arg0, %c0_i32 : i32, i32
  }
  func.func @transform_9(%arg0: i32) -> (i32, i32) {
    %c0_i32 = arith.constant 0 : i32
    %c0_i32_0 = arith.constant 0 : i32
    return %arg0, %c0_i32 : i32, i32
  }
}

</mosaic_0001>

<llo_original>
// kernel: tpu_custom_call.1
$region0: #{tpu_custom_call.1}
  #allocation0 [shape = 'u32[]', space=smem, size = 0x4, offset = 0x4, fixed_abs, tag = 'smem constant byte address 0x4 - core index']
  #allocation1 [shape = 'u32[144,128]{1,0:T(1,128)}', space=vmem, size = 0x12000, scoped, tag = 'internal scratch']
  %s0 = inlined_call_operand.vmem [shape: bf16[16,32], index: 0, kind: input, shape index: {}]
  %s1 = inlined_call_operand.hbm [shape: f32[16,128], index: 1, kind: input, shape index: {}, may-alias: {1,9}]
  %s2 = inlined_call_operand.vmem [shape: bf16[32,384], index: 2, kind: input, shape index: {}]
  %s3 = inlined_call_operand.hbm [shape: bf16[128,384], index: 3, kind: input, shape index: {}]
  %s4 = inlined_call_operand.hbm [shape: f32[1,384], index: 4, kind: input, shape index: {}]
  %s5 = inlined_call_operand.vmem [shape: f32[1,128], index: 5, kind: input, shape index: {}]
  %s6 = inlined_call_operand.hbm [shape: bf16[128,128], index: 6, kind: input, shape index: {}]
  %s7 = inlined_call_operand.vmem [shape: f32[1,128], index: 7, kind: input, shape index: {}]
  %s8 = inlined_call_operand.hbm [shape: f32[16,128], index: 8, kind: output, shape index: {0}]
  %s9 = inlined_call_operand.hbm [shape: f32[16,128], index: 9, kind: output, shape index: {1}, may-alias: {1,9}]
  %10 = xla_tuple %s8, %s9
  %s11 = sld [smem:[#allocation0]]
  $region66: #{tpu_custom_call.1} parent=0
    _
  %s13 = ssub.s32 1, %s11
  %s14 = scalar_select 0, %s13, %s11
  $region1: #{tpu_custom_call.1} parent=0
    #allocation2 [shape = 'u8[8192]{0}', space=vmem, size = 0x2000, scoped, tag = 'input window, operand 1, single buffered']
    #allocation3 [shape = 's32[1]{0}', space=sflag, size = 0x4, scoped, tag = 'scoped memory for tpu_custom_call.1']
    #allocation4 [shape = 's32[1]{0}', space=sflag, size = 0x4, scoped, tag = 'scoped memory for tpu_custom_call.1']
    #allocation5 [shape = 'u8[98304]{0}', space=vmem, size = 0x18000, scoped, tag = 'input window, operand 3, single buffered']
    #allocation6 [shape = 's32[1]{0}', space=sflag, size = 0x4, scoped, tag = 'scoped memory for tpu_custom_call.1']
    #allocation7 [shape = 'u8[1536]{0}', space=vmem, size = 0x800, scoped, tag = 'input window, operand 4, single buffered']
    #allocation8 [shape = 'u8[32768]{0}', space=vmem, size = 0x8000, scoped, tag = 'input window, operand 6, single buffered']
    #allocation9 [shape = 's32[1]{0}', space=sflag, size = 0x4, scoped, tag = 'scoped memory for tpu_custom_call.1']
    #allocation10 [shape = 'u8[8192]{0}', space=vmem, size = 0x2000, scoped, tag = 'output window, operand 0, single buffered']
    #allocation11 [shape = 'u8[8192]{0}', space=vmem, size = 0x2000, scoped, tag = 'output window, operand 1, single buffered']
    #allocation12 [shape = 's32[1]{0}', space=sflag, size = 0x4, scoped, tag = 'scoped memory for tpu_custom_call.1']
    %15 = vsyncpa [#allocation3], 0
    %16 = vsyncpa [#allocation6], 0
    %17 = vsyncpa [#allocation9], 0
    %18 = vsyncpa [#allocation4], 0
    %19 = vsyncpa [#allocation12], 0
    // Predicated region
    $region2: #{tpu_custom_call.1} parent=1 // pred_check
      _
    $region3: #{tpu_custom_call.1} parent=1 // pred_check_branch
      %21 = sbr.rel (0) target = $region5
    $region4: #{tpu_custom_call.1} parent=1 // pred_region
      _
    $region5: #{tpu_custom_call.1} parent=1 // pred_fallthru
      _
    // Predicated region
    $region6: #{tpu_custom_call.1} parent=1 // pred_check
      _
    $region7: #{tpu_custom_call.1} parent=1 // pred_check_branch
      %23 = sbr.rel (0) target = $region9
    $region8: #{tpu_custom_call.1} parent=1 // pred_region
      %s25 = ssub.s32 256, 256
      %26 = vsyncadd [#allocation3], %s25
      %s27 = sshll.u32 [#allocation2], 4
      %s28 = int_to_ptr.vmem [resolvable:$true] %s27
      %33 = dma.hbm_to_vmem [thread:$0]  %s1, 256, %s28, [#allocation3], 128, 128, 8
    $region9: #{tpu_custom_call.1} parent=1 // pred_fallthru
      _
    // Predicated region
    $region10: #{tpu_custom_call.1} parent=1 // pred_check
      _
    $region11: #{tpu_custom_call.1} parent=1 // pred_check_branch
      %35 = sbr.rel (0) target = $region13
    $region12: #{tpu_custom_call.1} parent=1 // pred_region
      _
    $region13: #{tpu_custom_call.1} parent=1 // pred_fallthru
      _
    // Predicated region
    $region14: #{tpu_custom_call.1} parent=1 // pred_check
      _
    $region15: #{tpu_custom_call.1} parent=1 // pred_check_branch
      %37 = sbr.rel (0) target = $region17
    $region16: #{tpu_custom_call.1} parent=1 // pred_region
      %s39 = ssub.s32 3072, 3072
      %40 = vsyncadd [#allocation6], %s39
      %s41 = sshll.u32 [#allocation5], 4
      %s42 = int_to_ptr.vmem [resolvable:$true] %s41
      %47 = dma.hbm_to_vmem [thread:$0]  %s3, 3072, %s42, [#allocation6], 192, 192, 12
    $region17: #{tpu_custom_call.1} parent=1 // pred_fallthru
      _
    // Predicated region
    $region18: #{tpu_custom_call.1} parent=1 // pred_check
      _
    $region19: #{tpu_custom_call.1} parent=1 // pred_check_branch
      %49 = sbr.rel (0) target = $region21
    $region20: #{tpu_custom_call.1} parent=1 // pred_region
      %s51 = ssub.s32 48, 48
      %52 = vsyncadd [#allocation6], %s51
      %s54 = sshll.u32 [#allocation7], 4
      %s55 = int_to_ptr.vmem [resolvable:$true] %s54
      %57 = dma.hbm_to_vmem [thread:$0]  %s4, 48, %s55, [#allocation6]
    $region21: #{tpu_custom_call.1} parent=1 // pred_fallthru
      _
    // Predicated region
    $region22: #{tpu_custom_call.1} parent=1 // pred_check
      _
    $region23: #{tpu_custom_call.1} parent=1 // pred_check_branch
      %59 = sbr.rel (0) target = $region25
    $region24: #{tpu_custom_call.1} parent=1 // pred_region
      _
    $region25: #{tpu_custom_call.1} parent=1 // pred_fallthru
      _
    // Predicated region
    $region26: #{tpu_custom_call.1} parent=1 // pred_check
      _
    $region27: #{tpu_custom_call.1} parent=1 // pred_check_branch
      %61 = sbr.rel (0) target = $region29
    $region28: #{tpu_custom_call.1} parent=1 // pred_region
      %s63 = ssub.s32 1024, 1024
      %64 = vsyncadd [#allocation9], %s63
      %s65 = sshll.u32 [#allocation8], 4
      %s66 = int_to_ptr.vmem [resolvable:$true] %s65
      %71 = dma.hbm_to_vmem [thread:$0]  %s6, 1024, %s66, [#allocation9], 64, 64, 4
    $region29: #{tpu_custom_call.1} parent=1 // pred_fallthru
      _
    // Predicated region
    $region30: #{tpu_custom_call.1} parent=1 // pred_check
      _
    $region31: #{tpu_custom_call.1} parent=1 // pred_check_branch
      %73 = sbr.rel (0) target = $region33
    $region32: #{tpu_custom_call.1} parent=1 // pred_region
      _
    $region33: #{tpu_custom_call.1} parent=1 // pred_fallthru
      _
    // Predicated region
    $region34: #{tpu_custom_call.1} parent=1 // pred_check
      _
    $region35: #{tpu_custom_call.1} parent=1 // pred_check_branch
      %75 = sbr.rel (0) target = $region37
    $region36: #{tpu_custom_call.1} parent=1 // pred_region
      %76 = dma.done [#allocation3], 256
    $region37: #{tpu_custom_call.1} parent=1 // pred_fallthru
      _
    // Predicated region
    $region38: #{tpu_custom_call.1} parent=1 // pred_check
      _
    $region39: #{tpu_custom_call.1} parent=1 // pred_check_branch
      %78 = sbr.rel (0) target = $region41
    $region40: #{tpu_custom_call.1} parent=1 // pred_region
      %79 = dma.done [#allocation6], 3072
    $region41: #{tpu_custom_call.1} parent=1 // pred_fallthru
      _
    // Predicated region
    $region42: #{tpu_custom_call.1} parent=1 // pred_check
      _
    $region43: #{tpu_custom_call.1} parent=1 // pred_check_branch
      %81 = sbr.rel (0) target = $region45
    $region44: #{tpu_custom_call.1} parent=1 // pred_region
      %82 = dma.done [#allocation6], 48
    $region45: #{tpu_custom_call.1} parent=1 // pred_fallthru
      _
    // Predicated region
    $region46: #{tpu_custom_call.1} parent=1 // pred_check
      _
    $region47: #{tpu_custom_call.1} parent=1 // pred_check_branch
      %84 = sbr.rel (0) target = $region49
    $region48: #{tpu_custom_call.1} parent=1 // pred_region
      %85 = dma.done [#allocation9], 1024
    $region49: #{tpu_custom_call.1} parent=1 // pred_fallthru
      _
    %v87 = vld [vmem:[%s2] sm:$0xff]
    %v88 = vld [vmem:[%s2 + $0x8] sm:$0xf]
    %v89 = vld [vmem:[%s2 + $0xc] sm:$0xff]
    %v90 = vld [vmem:[%s2 + $0x14] sm:$0xf]
    %v91 = vld [vmem:[%s2 + $0x18] sm:$0xff]
    %v92 = vld [vmem:[%s2 + $0x20] sm:$0xf]
    %v93 = vld [vmem:[%s2 + $0x24] sm:$0xff]
    %v94 = vld [vmem:[%s2 + $0x2c] sm:$0xf]
    %v95 = vld [vmem:[#allocation5] sm:$0xff]
    %v96 = vld [vmem:[#allocation5 + $0x8] sm:$0xf]
    %v97 = vld [vmem:[#allocation5 + $0xc] sm:$0xff]
    %v98 = vld [vmem:[#allocation5 + $0x14] sm:$0xf]
    %v99 = vld [vmem:[#allocation5 + $0x18] sm:$0xff]
    %v100 = vld [vmem:[#allocation5 + $0x20] sm:$0xf]
    %v101 = vld [vmem:[#allocation5 + $0x24] sm:$0xff]
    %v102 = vld [vmem:[#allocation5 + $0x2c] sm:$0xf]
    %v103 = vld [vmem:[#allocation5 + $0x30] sm:$0xff]
    %v104 = vld [vmem:[#allocation5 + $0x38] sm:$0xf]
    %v105 = vld [vmem:[#allocation5 + $0x3c] sm:$0xff]
    %v106 = vld [vmem:[#allocation5 + $0x44] sm:$0xf]
    %v107 = vld [vmem:[#allocation5 + $0x48] sm:$0xff]
    %v108 = vld [vmem:[#allocation5 + $0x50] sm:$0xf]
    %v109 = vld [vmem:[#allocation5 + $0x54] sm:$0xff]
    %v110 = vld [vmem:[#allocation5 + $0x5c] sm:$0xf]
    %v111 = vld [vmem:[#allocation5 + $0x60] sm:$0xff]
    %v112 = vld [vmem:[#allocation5 + $0x68] sm:$0xf]
    %v113 = vld [vmem:[#allocation5 + $0x6c] sm:$0xff]
    %v114 = vld [vmem:[#allocation5 + $0x74] sm:$0xf]
    %v115 = vld [vmem:[#allocation5 + $0x78] sm:$0xff]
    %v116 = vld [vmem:[#allocation5 + $0x80] sm:$0xf]
    %v117 = vld [vmem:[#allocation5 + $0x84] sm:$0xff]
    %v118 = vld [vmem:[#allocation5 + $0x8c] sm:$0xf]
    %v119 = vld [vmem:[#allocation5 + $0x90] sm:$0xff]
    %v120 = vld [vmem:[#allocation5 + $0x98] sm:$0xf]
    %v121 = vld [vmem:[#allocation5 + $0x9c] sm:$0xff]
    %v122 = vld [vmem:[#allocation5 + $0xa4] sm:$0xf]
    %v123 = vld [vmem:[#allocation5 + $0xa8] sm:$0xff]
    %v124 = vld [vmem:[#allocation5 + $0xb0] sm:$0xf]
    %v125 = vld [vmem:[#allocation5 + $0xb4] sm:$0xff]
    %v126 = vld [vmem:[#allocation5 + $0xbc] sm:$0xf]
    %v127 = vld [vmem:[#allocation8] sm:$0xf]
    %v128 = vld [vmem:[#allocation8 + $0x4] sm:$0xf]
    %v129 = vld [vmem:[#allocation8 + $0x8] sm:$0xf]
    %v130 = vld [vmem:[#allocation8 + $0xc] sm:$0xf]
    %v131 = vld [vmem:[#allocation8 + $0x10] sm:$0xf]
    %v132 = vld [vmem:[#allocation8 + $0x14] sm:$0xf]
    %v133 = vld [vmem:[#allocation8 + $0x18] sm:$0xf]
    %v134 = vld [vmem:[#allocation8 + $0x1c] sm:$0xf]
    %v135 = vld [vmem:[#allocation8 + $0x20] sm:$0xf]
    %v136 = vld [vmem:[#allocation8 + $0x24] sm:$0xf]
    %v137 = vld [vmem:[#allocation8 + $0x28] sm:$0xf]
    %v138 = vld [vmem:[#allocation8 + $0x2c] sm:$0xf]
    %v139 = vld [vmem:[#allocation8 + $0x30] sm:$0xf]
    %v140 = vld [vmem:[#allocation8 + $0x34] sm:$0xf]
    %v141 = vld [vmem:[#allocation8 + $0x38] sm:$0xf]
    %v142 = vld [vmem:[#allocation8 + $0x3c] sm:$0xf]
    %v143 = vld [vmem:[#allocation7] sm:$0x7]
    %v144 = vld [vmem:[%s5] sm:$0x1]
    %v145 = vld [vmem:[%s7] sm:$0x1]
    %v146 = vlaneseq
    %v147 = vand.u32 %v146, 127
    %vm148 = vcmp.lt.s32.totalorder %v147, 64
    %v149 = vld [vmem:[%s0] sm:$0xf]
    %v150 = vld [vmem:[%s0 + $0x4] sm:$0xf]
    %v151 = vld [vmem:[#allocation2] sm:$0xff]
    %v152 = vld [vmem:[#allocation2 + $0x8] sm:$0xff]
    %v154 = vlaneseq
    %v155 = vshrl.u32 %v154, 7
    %v156 = vsub.s32 0, %v155
    %v157 = vrot.slane %v143, %v156
    %v158 = vlaneseq
    %v159 = vshrl.u32 %v158, 7
    %v160 = vsub.s32 1, %v159
    %v161 = vrot.slane %v143, %v160
    %v162 = vlaneseq
    %v163 = vshrl.u32 %v162, 7
    %v164 = vsub.s32 2, %v163
    %v165 = vrot.slane %v143, %v164
    %v171 = vunpack.c.l.b16 %v149
    %v172 = vunpack.c.l.b16 %v150
    %v173 = vpack.c.b16 %v172, %v171
    %v182 = vunpack.c.l.b16 %v87
    %v183 = vunpack.c.h.b16 %v87
    %v184 = vunpack.c.l.b16 %v88
    %v185 = vunpack.c.l.b16 %v89
    %v186 = vunpack.c.h.b16 %v89
    %v187 = vunpack.c.l.b16 %v90
    %v188 = vunpack.c.l.b16 %v91
    %v189 = vunpack.c.h.b16 %v91
    %v190 = vunpack.c.l.b16 %v92
    %v191 = vunpack.c.l.b16 %v93
    %v192 = vunpack.c.h.b16 %v93
    %v193 = vunpack.c.l.b16 %v94
    %v194 = vpack.c.b16 %v185, %v182
    %v195 = vpack.c.b16 %v186, %v183
    %v196 = vpack.c.b16 %v187, %v184
    %v197 = vpack.c.b16 %v191, %v188
    %v198 = vpack.c.b16 %v192, %v189
    %v199 = vpack.c.b16 %v193, %v190
    %vm206 = vcmask 261120
    %v208 = vsel %vm206, %v173, 0
    %210 = vmatprep.subr.bf16.mxu0 %v195
    %211 = vmatpush1.bf16.msra.mxu0 %v194
    %212 = vmatprep.subr.bf16.mxu0 %v198
    %213 = vmatpush1.bf16.msra.mxu0 %v197
    %214 = vmatprep.subr.bf16.mxu0 0
    %215 = vmatpush1.bf16.msra.mxu0 0
    %216 = vmatprep.subr.bf16.mxu0 0
    %217 = vmatpush1.bf16.msra.mxu0 0
    %218 = vmatprep.subr.bf16.mxu0 0
    %219 = vmatpush1.bf16.msra.mxu0 0
    %220 = vmatprep.subr.bf16.mxu0 0
    %221 = vmatpush1.bf16.msra.mxu0 0
    %222 = vmatprep.subr.bf16.mxu0 0
    %223 = vmatpush1.bf16.msra.mxu0 0
    %224 = vmatprep.subr.bf16.mxu0 0
    %225 = vmatpush1.bf16.msra.mxu0 0
    %226 = vmatprep.subr.bf16.mxu0 0
    %227 = vmatpush1.bf16.msra.mxu0 0
    %228 = vmatprep.subr.bf16.mxu0 0
    %229 = vmatpush1.bf16.msra.mxu0 0
    %230 = vmatprep.subr.bf16.mxu0 0
    %231 = vmatpush1.bf16.msra.mxu0 0
    %232 = vmatprep.subr.bf16.mxu0 0
    %233 = vmatpush1.bf16.msra.mxu0 0
    %234 = vmatprep.subr.bf16.mxu0 0
    %235 = vmatpush1.bf16.msra.mxu0 0
    %236 = vmatprep.subr.bf16.mxu0 0
    %237 = vmatpush1.bf16.msra.mxu0 0
    %238 = vmatprep.subr.bf16.mxu0 0
    %239 = vmatpush1.bf16.msra.mxu0 0
    %240 = vmatprep.subr.bf16.mxu0 0
    %241 = vmatpush1.bf16.msra.mxu0 0
    %242 = vmatprep.mubr.bf16.mxu0 0
    %243 = vmatmul.mubr.bf16.gmra.mrb[0].mxu0 %v208
    %v244 = vpop.f32.mrb[0].mxu0
    %v245 = vadd.f32 %v157, %v244
    %v246 = vpop.f32.mrb[0].mxu0
    %v247 = vadd.f32 %v161, %v246
    %v248 = vpop.f32.mrb[0].mxu0
    %v249 = vadd.f32 %v157, %v248
    %v250 = vpop.f32.mrb[0].mxu0
    %v251 = vadd.f32 %v161, %v250
    %252 = vdwg.mxu0
    %253 = vmatprep.subr.bf16.mxu0 0
    %254 = vmatpush1.bf16.msra.mxu0 %v196
    %255 = vmatprep.subr.bf16.mxu0 0
    %256 = vmatpush1.bf16.msra.mxu0 %v199
    %257 = vmatprep.subr.bf16.mxu0 0
    %258 = vmatpush1.bf16.msra.mxu0 0
    %259 = vmatprep.subr.bf16.mxu0 0
    %260 = vmatpush1.bf16.msra.mxu0 0
    %261 = vmatprep.subr.bf16.mxu0 0
    %262 = vmatpush1.bf16.msra.mxu0 0
    %263 = vmatprep.subr.bf16.mxu0 0
    %264 = vmatpush1.bf16.msra.mxu0 0
    %265 = vmatprep.subr.bf16.mxu0 0
    %266 = vmatpush1.bf16.msra.mxu0 0
    %267 = vmatprep.subr.bf16.mxu0 0
    %268 = vmatpush1.bf16.msra.mxu0 0
    %269 = vmatprep.subr.bf16.mxu0 0
    %270 = vmatpush1.bf16.msra.mxu0 0
    %271 = vmatprep.subr.bf16.mxu0 0
    %272 = vmatpush1.bf16.msra.mxu0 0
    %273 = vmatprep.subr.bf16.mxu0 0
    %274 = vmatpush1.bf16.msra.mxu0 0
    %275 = vmatprep.subr.bf16.mxu0 0
    %276 = vmatpush1.bf16.msra.mxu0 0
    %277 = vmatprep.subr.bf16.mxu0 0
    %278 = vmatpush1.bf16.msra.mxu0 0
    %279 = vmatprep.subr.bf16.mxu0 0
    %280 = vmatpush1.bf16.msra.mxu0 0
    %281 = vmatprep.subr.bf16.mxu0 0
    %282 = vmatpush1.bf16.msra.mxu0 0
    %283 = vmatprep.subr.bf16.mxu0 0
    %284 = vmatpush1.bf16.msra.mxu0 0
    %285 = vmatprep.mubr.bf16.mxu0 0
    %286 = vmatmul.mubr.bf16.gmra.mrb[0].mxu0 %v208
    %v287 = vpop.f32.mrb[0].mxu0
    %v288 = vadd.f32 %v165, %v287
    %v289 = vpop.f32.mrb[0].mxu0
    %v290 = vpop.f32.mrb[0].mxu0
    %v291 = vadd.f32 %v165, %v290
    %v292 = vpop.f32.mrb[0].mxu0
    %293 = vdwg.mxu0
    %v294 = vpack.c.bf16 %v152, %v151
    %v327 = vunpack.c.l.b16 %v95
    %v328 = vunpack.c.h.b16 %v95
    %v329 = vunpack.c.l.b16 %v96
    %v330 = vunpack.c.l.b16 %v97
    %v331 = vunpack.c.h.b16 %v97
    %v332 = vunpack.c.l.b16 %v98
    %v333 = vunpack.c.l.b16 %v99
    %v334 = vunpack.c.h.b16 %v99
    %v335 = vunpack.c.l.b16 %v100
    %v336 = vunpack.c.l.b16 %v101
    %v337 = vunpack.c.h.b16 %v101
    %v338 = vunpack.c.l.b16 %v102
    %v339 = vunpack.c.l.b16 %v103
    %v340 = vunpack.c.h.b16 %v103
    %v341 = vunpack.c.l.b16 %v104
    %v342 = vunpack.c.l.b16 %v105
    %v343 = vunpack.c.h.b16 %v105
    %v344 = vunpack.c.l.b16 %v106
    %v345 = vunpack.c.l.b16 %v107
    %v346 = vunpack.c.h.b16 %v107
    %v347 = vunpack.c.l.b16 %v108
    %v348 = vunpack.c.l.b16 %v109
    %v349 = vunpack.c.h.b16 %v109
    %v350 = vunpack.c.l.b16 %v110
    %v351 = vunpack.c.l.b16 %v111
    %v352 = vunpack.c.h.b16 %v111
    %v353 = vunpack.c.l.b16 %v112
    %v354 = vunpack.c.l.b16 %v113
    %v355 = vunpack.c.h.b16 %v113
    %v356 = vunpack.c.l.b16 %v114
    %v357 = vunpack.c.l.b16 %v115
    %v358 = vunpack.c.h.b16 %v115
    %v359 = vunpack.c.l.b16 %v116
    %v360 = vunpack.c.l.b16 %v117
    %v361 = vunpack.c.h.b16 %v117
    %v362 = vunpack.c.l.b16 %v118
    %v363 = vunpack.c.l.b16 %v119
    %v364 = vunpack.c.h.b16 %v119
    %v365 = vunpack.c.l.b16 %v120
    %v366 = vunpack.c.l.b16 %v121
    %v367 = vunpack.c.h.b16 %v121
    %v368 = vunpack.c.l.b16 %v122
    %v369 = vunpack.c.l.b16 %v123
    %v370 = vunpack.c.h.b16 %v123
    %v371 = vunpack.c.l.b16 %v124
    %v372 = vunpack.c.l.b16 %v125
    %v373 = vunpack.c.h.b16 %v125
    %v374 = vunpack.c.l.b16 %v126
    %v375 = vpack.c.b16 %v330, %v327
    %v376 = vpack.c.b16 %v331, %v328
    %v377 = vpack.c.b16 %v332, %v329
    %v378 = vpack.c.b16 %v336, %v333
    %v379 = vpack.c.b16 %v337, %v334
    %v380 = vpack.c.b16 %v338, %v335
    %v381 = vpack.c.b16 %v342, %v339
    %v382 = vpack.c.b16 %v343, %v340
    %v383 = vpack.c.b16 %v344, %v341
    %v384 = vpack.c.b16 %v348, %v345
    %v385 = vpack.c.b16 %v349, %v346
    %v386 = vpack.c.b16 %v350, %v347
    %v387 = vpack.c.b16 %v354, %v351
    %v388 = vpack.c.b16 %v355, %v352
    %v389 = vpack.c.b16 %v356, %v353
    %v390 = vpack.c.b16 %v360, %v357
    %v391 = vpack.c.b16 %v361, %v358
    %v392 = vpack.c.b16 %v362, %v359
    %v393 = vpack.c.b16 %v366, %v363
    %v394 = vpack.c.b16 %v367, %v364
    %v395 = vpack.c.b16 %v368, %v365
    %v396 = vpack.c.b16 %v372, %v369
    %v397 = vpack.c.b16 %v373, %v370
    %v398 = vpack.c.b16 %v374, %v371
    %423 = vmatprep.subr.bf16.mxu0 %v376
    %424 = vmatpush1.bf16.msra.mxu0 %v375
    %425 = vmatprep.subr.bf16.mxu0 %v379
    %426 = vmatpush1.bf16.msra.mxu0 %v378
    %427 = vmatprep.subr.bf16.mxu0 %v382
    %428 = vmatpush1.bf16.msra.mxu0 %v381
    %429 = vmatprep.subr.bf16.mxu0 %v385
    %430 = vmatpush1.bf16.msra.mxu0 %v384
    %431 = vmatprep.subr.bf16.mxu0 %v388
    %432 = vmatpush1.bf16.msra.mxu0 %v387
    %433 = vmatprep.subr.bf16.mxu0 %v391
    %434 = vmatpush1.bf16.msra.mxu0 %v390
    %435 = vmatprep.subr.bf16.mxu0 %v394
    %436 = vmatpush1.bf16.msra.mxu0 %v393
    %437 = vmatprep.subr.bf16.mxu0 %v397
    %438 = vmatpush1.bf16.msra.mxu0 %v396
    %439 = vmatprep.subr.bf16.mxu0 0
    %440 = vmatpush1.bf16.msra.mxu0 0
    %441 = vmatprep.subr.bf16.mxu0 0
    %442 = vmatpush1.bf16.msra.mxu0 0
    %443 = vmatprep.subr.bf16.mxu0 0
    %444 = vmatpush1.bf16.msra.mxu0 0
    %445 = vmatprep.subr.bf16.mxu0 0
    %446 = vmatpush1.bf16.msra.mxu0 0
    %447 = vmatprep.subr.bf16.mxu0 0
    %448 = vmatpush1.bf16.msra.mxu0 0
    %449 = vmatprep.subr.bf16.mxu0 0
    %450 = vmatpush1.bf16.msra.mxu0 0
    %451 = vmatprep.subr.bf16.mxu0 0
    %452 = vmatpush1.bf16.msra.mxu0 0
    %453 = vmatprep.subr.bf16.mxu0 0
    %454 = vmatpush1.bf16.msra.mxu0 0
    %455 = vmatprep.mubr.bf16.mxu0 0
    %456 = vmatmul.mubr.bf16.gmra.mrb[0].mxu0 %v294
    %v457 = vpop.f32.mrb[0].mxu0
    %v458 = vadd.f32 0.0, %v457
    %v459 = vpop.f32.mrb[0].mxu0
    %v460 = vadd.f32 0.0, %v459
    %v461 = vpop.f32.mrb[0].mxu0
    %v462 = vadd.f32 0.0, %v461
    %v463 = vpop.f32.mrb[0].mxu0
    %v464 = vadd.f32 0.0, %v463
    %465 = vdwg.mxu0
    %466 = vmatprep.subr.bf16.mxu0 0
    %467 = vmatpush1.bf16.msra.mxu0 %v377
    %468 = vmatprep.subr.bf16.mxu0 0
    %469 = vmatpush1.bf16.msra.mxu0 %v380
    %470 = vmatprep.subr.bf16.mxu0 0
    %471 = vmatpush1.bf16.msra.mxu0 %v383
    %472 = vmatprep.subr.bf16.mxu0 0
    %473 = vmatpush1.bf16.msra.mxu0 %v386
    %474 = vmatprep.subr.bf16.mxu0 0
    %475 = vmatpush1.bf16.msra.mxu0 %v389
    %476 = vmatprep.subr.bf16.mxu0 0
    %477 = vmatpush1.bf16.msra.mxu0 %v392
    %478 = vmatprep.subr.bf16.mxu0 0
    %479 = vmatpush1.bf16.msra.mxu0 %v395
    %480 = vmatprep.subr.bf16.mxu0 0
    %481 = vmatpush1.bf16.msra.mxu0 %v398
    %482 = vmatprep.subr.bf16.mxu0 0
    %483 = vmatpush1.bf16.msra.mxu0 0
    %484 = vmatprep.subr.bf16.mxu0 0
    %485 = vmatpush1.bf16.msra.mxu0 0
    %486 = vmatprep.subr.bf16.mxu0 0
    %487 = vmatpush1.bf16.msra.mxu0 0
    %488 = vmatprep.subr.bf16.mxu0 0
    %489 = vmatpush1.bf16.msra.mxu0 0
    %490 = vmatprep.subr.bf16.mxu0 0
    %491 = vmatpush1.bf16.msra.mxu0 0
    %492 = vmatprep.subr.bf16.mxu0 0
    %493 = vmatpush1.bf16.msra.mxu0 0
    %494 = vmatprep.subr.bf16.mxu0 0
    %495 = vmatpush1.bf16.msra.mxu0 0
    %496 = vmatprep.subr.bf16.mxu0 0
    %497 = vmatpush1.bf16.msra.mxu0 0
    %498 = vmatprep.mubr.bf16.mxu0 0
    %499 = vmatmul.mubr.bf16.gmra.mrb[0].mxu0 %v294
    %v500 = vpop.f32.mrb[0].mxu0
    %v501 = vadd.f32 0.0, %v500
    %v502 = vpop.f32.mrb[0].mxu0
    %v503 = vpop.f32.mrb[0].mxu0
    %v504 = vadd.f32 0.0, %v503
    %v505 = vpop.f32.mrb[0].mxu0
    %506 = vdwg.mxu0
    %v507 = vadd.f32 %v245, %v458
    %v508 = vadd.f32 %v249, %v462
    %v509 = vxor.u32 %v507, 2147483648
    %v510 = vxor.u32 %v508, 2147483648
    %v511 = vmul.f32 %v509, 1.442695
    %v512 = vpow.pop %v511
    %v513 = vmul.f32 %v510, 1.442695
    %v514 = vpow.pop %v513
    %v515 = vadd.f32 %v512, 1.0
    %v516 = vadd.f32 %v514, 1.0
    %v517 = vrcp.pop %v515
    %v518 = vmul.f32 1.0, %v517
    %v519 = vrcp.pop %v516
    %v520 = vmul.f32 1.0, %v519
    %v521 = vadd.f32 %v247, %v460
    %v522 = vadd.f32 %v251, %v464
    %v523 = vxor.u32 %v521, 2147483648
    %v524 = vxor.u32 %v522, 2147483648
    %v525 = vmul.f32 %v523, 1.442695
    %v526 = vpow.pop %v525
    %v527 = vmul.f32 %v524, 1.442695
    %v528 = vpow.pop %v527
    %v529 = vadd.f32 %v526, 1.0
    %v530 = vadd.f32 %v528, 1.0
    %v531 = vrcp.pop %v529
    %v532 = vmul.f32 1.0, %v531
    %v533 = vrcp.pop %v530
    %v534 = vmul.f32 1.0, %v533
    %v536 = vlaneseq
    %v537 = vshrl.u32 %v536, 7
    %v538 = vsub.s32 0, %v537
    %v539 = vrot.slane %v144, %v538
    %v541 = vadd.f32 %v501, %v539
    %v542 = vadd.f32 %v504, %v539
    %v543 = vmul.f32 %v518, %v541
    %v544 = vmul.f32 %v520, %v542
    %v545 = vadd.f32 %v288, %v543
    %v546 = vadd.f32 %v291, %v544
    %v547 = vtanh.pop %v545
    %v548 = vtanh.pop %v546
    %v549 = vsub.f32 1.0, %v532
    %v550 = vsub.f32 1.0, %v534
    %v551 = vmul.f32 %v549, %v547
    %v552 = vmul.f32 %v550, %v548
    %v553 = vmul.f32 %v532, %v151
    %v554 = vmul.f32 %v534, %v152
    %v555 = vadd.f32 %v551, %v553
    %v556 = vadd.f32 %v552, %v554
    %v557 = vsel %vm148, %v555, 0.0
    %v558 = vsel %vm148, %v556, 0.0
    %559 = vst [vmem:[#allocation11] sm:$0xff] %v557
    %560 = vst [vmem:[#allocation11 + $0x8] sm:$0xff] %v558
    %v561 = vpack.c.bf16 %v558, %v557
    %v563 = vlaneseq
    %v564 = vshrl.u32 %v563, 7
    %v565 = vsub.s32 0, %v564
    %v566 = vrot.slane %v145, %v565
    %v584 = vunpack.c.l.b16 %v127
    %v585 = vunpack.c.l.b16 %v128
    %v586 = vunpack.c.l.b16 %v129
    %v587 = vunpack.c.l.b16 %v130
    %v588 = vunpack.c.l.b16 %v131
    %v589 = vunpack.c.l.b16 %v132
    %v590 = vunpack.c.l.b16 %v133
    %v591 = vunpack.c.l.b16 %v134
    %v592 = vunpack.c.l.b16 %v135
    %v593 = vunpack.c.l.b16 %v136
    %v594 = vunpack.c.l.b16 %v137
    %v595 = vunpack.c.l.b16 %v138
    %v596 = vunpack.c.l.b16 %v139
    %v597 = vunpack.c.l.b16 %v140
    %v598 = vunpack.c.l.b16 %v141
    %v599 = vunpack.c.l.b16 %v142
    %v600 = vpack.c.b16 %v585, %v584
    %v601 = vpack.c.b16 %v587, %v586
    %v602 = vpack.c.b16 %v589, %v588
    %v603 = vpack.c.b16 %v591, %v590
    %v604 = vpack.c.b16 %v593, %v592
    %v605 = vpack.c.b16 %v595, %v594
    %v606 = vpack.c.b16 %v597, %v596
    %v607 = vpack.c.b16 %v599, %v598
    %616 = vmatprep.subr.bf16.mxu0 0
    %617 = vmatpush1.bf16.msra.mxu0 %v600
    %618 = vmatprep.subr.bf16.mxu0 0
    %619 = vmatpush1.bf16.msra.mxu0 %v601
    %620 = vmatprep.subr.bf16.mxu0 0
    %621 = vmatpush1.bf16.msra.mxu0 %v602
    %622 = vmatprep.subr.bf16.mxu0 0
    %623 = vmatpush1.bf16.msra.mxu0 %v603
    %624 = vmatprep.subr.bf16.mxu0 0
    %625 = vmatpush1.bf16.msra.mxu0 %v604
    %626 = vmatprep.subr.bf16.mxu0 0
    %627 = vmatpush1.bf16.msra.mxu0 %v605
    %628 = vmatprep.subr.bf16.mxu0 0
    %629 = vmatpush1.bf16.msra.mxu0 %v606
    %630 = vmatprep.subr.bf16.mxu0 0
    %631 = vmatpush1.bf16.msra.mxu0 %v607
    %632 = vmatprep.subr.bf16.mxu0 0
    %633 = vmatpush1.bf16.msra.mxu0 0
    %634 = vmatprep.subr.bf16.mxu0 0
    %635 = vmatpush1.bf16.msra.mxu0 0
    %636 = vmatprep.subr.bf16.mxu0 0
    %637 = vmatpush1.bf16.msra.mxu0 0
    %638 = vmatprep.subr.bf16.mxu0 0
    %639 = vmatpush1.bf16.msra.mxu0 0
    %640 = vmatprep.subr.bf16.mxu0 0
    %641 = vmatpush1.bf16.msra.mxu0 0
    %642 = vmatprep.subr.bf16.mxu0 0
    %643 = vmatpush1.bf16.msra.mxu0 0
    %644 = vmatprep.subr.bf16.mxu0 0
    %645 = vmatpush1.bf16.msra.mxu0 0
    %646 = vmatprep.subr.bf16.mxu0 0
    %647 = vmatpush1.bf16.msra.mxu0 0
    %648 = vmatprep.mubr.bf16.mxu0 0
    %649 = vmatmul.mubr.bf16.gmra.mrb[0].mxu0 %v561
    %v650 = vpop.f32.mrb[0].mxu0
    %v651 = vadd.f32 %v566, %v650
    %v652 = vpop.f32.mrb[0].mxu0
    %v653 = vpop.f32.mrb[0].mxu0
    %v654 = vadd.f32 %v566, %v653
    %v655 = vpop.f32.mrb[0].mxu0
    %656 = vdwg.mxu0
    %657 = vst [vmem:[#allocation10] sm:$0xff] %v651
    %658 = vst [vmem:[#allocation10 + $0x8] sm:$0xff] %v654
    // Predicated region
    $region50: #{tpu_custom_call.1} parent=1 // pred_check
      _
    $region51: #{tpu_custom_call.1} parent=1 // pred_check_branch
      %660 = sbr.rel (0) target = $region53
    $region52: #{tpu_custom_call.1} parent=1 // pred_region
      %s662 = ssub.s32 256, 256
      %663 = vsyncadd [#allocation4], %s662
      %s664 = sshll.u32 [#allocation10], 4
      %s665 = int_to_ptr.vmem [resolvable:$true] %s664
      %670 = dma.vmem_to_hbm [thread:$0]  %s665, 256, %s8, [#allocation4], 128, 128, 8
    $region53: #{tpu_custom_call.1} parent=1 // pred_fallthru
      _
    // Predicated region
    $region54: #{tpu_custom_call.1} parent=1 // pred_check
      _
    $region55: #{tpu_custom_call.1} parent=1 // pred_check_branch
      %672 = sbr.rel (0) target = $region57
    $region56: #{tpu_custom_call.1} parent=1 // pred_region
      %s674 = ssub.s32 256, 256
      %675 = vsyncadd [#allocation12], %s674
      %s676 = sshll.u32 [#allocation11], 4
      %s677 = int_to_ptr.vmem [resolvable:$true] %s676
      %682 = dma.vmem_to_hbm [thread:$0]  %s677, 256, %s9, [#allocation12], 128, 128, 8
    $region57: #{tpu_custom_call.1} parent=1 // pred_fallthru
      _
    // Predicated region
    $region58: #{tpu_custom_call.1} parent=1 // pred_check
      _
    $region59: #{tpu_custom_call.1} parent=1 // pred_check_branch
      %684 = sbr.rel (0) target = $region61
    $region60: #{tpu_custom_call.1} parent=1 // pred_region
      %685 = dma.done [#allocation4], 256
    $region61: #{tpu_custom_call.1} parent=1 // pred_fallthru
      _
    // Predicated region
    $region62: #{tpu_custom_call.1} parent=1 // pred_check
      _
    $region63: #{tpu_custom_call.1} parent=1 // pred_check_branch
      %687 = sbr.rel (0) target = $region65
    $region64: #{tpu_custom_call.1} parent=1 // pred_region
      %688 = dma.done [#allocation12], 256
    $region65: #{tpu_custom_call.1} parent=1 // pred_fallthru
      _
    %689 = vsyncpa [#allocation3], 1
    %690 = vsyncpa [#allocation6], 1
    %691 = vsyncpa [#allocation9], 1
    %692 = vsyncpa [#allocation4], 1
    %693 = vsyncpa [#allocation12], 1

// kernel: tpu_custom_call.1
$region0: #{tpu_custom_call.1}
  #allocation0 [shape = 'u32[]', space=smem, size = 0x4, offset = 0x4, fixed_abs, tag = 'smem constant byte address 0x4 - core index']
  #allocation1 [shape = 'u32[144,128]{1,0:T(1,128)}', space=vmem, size = 0x12000, scoped, tag = 'internal scratch']
  %s0 = inlined_call_operand.vmem [shape: bf16[16,32], index: 0, kind: input, shape index: {}]
  %s1 = inlined_call_operand.hbm [shape: f32[16,128], index: 1, kind: input, shape index: {}, may-alias: {1,9}]
  %s2 = inlined_call_operand.vmem [shape: bf16[32,384], index: 2, kind: input, shape index: {}]
  %s3 = inlined_call_operand.hbm [shape: bf16[128,384], index: 3, kind: input, shape index: {}]
  %s4 = inlined_call_operand.hbm [shape: f32[1,384], index: 4, kind: input, shape index: {}]
  %s5 = inlined_call_operand.vmem [shape: f32[1,128], index: 5, kind: input, shape index: {}]
  %s6 = inlined_call_operand.hbm [shape: bf16[128,128], index: 6, kind: input, shape index: {}]
  %s7 = inlined_call_operand.vmem [shape: f32[1,128], index: 7, kind: input, shape index: {}]
  %s8 = inlined_call_operand.hbm [shape: f32[16,128], index: 8, kind: output, shape index: {0}]
  %s9 = inlined_call_operand.hbm [shape: f32[16,128], index: 9, kind: output, shape index: {1}, may-alias: {1,9}]
  %10 = xla_tuple %s8, %s9
  %s11 = sld [smem:[#allocation0]]
  $region66: #{tpu_custom_call.1} parent=0
    _
  %s13 = ssub.s32 1, %s11
  %s14 = scalar_select 0, %s13, %s11
  $region1: #{tpu_custom_call.1} parent=0
    #allocation2 [shape = 'u8[8192]{0}', space=vmem, size = 0x2000, scoped, tag = 'input window, operand 1, single buffered']
    #allocation3 [shape = 's32[1]{0}', space=sflag, size = 0x4, scoped, tag = 'scoped memory for tpu_custom_call.1']
    #allocation4 [shape = 's32[1]{0}', space=sflag, size = 0x4, scoped, tag = 'scoped memory for tpu_custom_call.1']
    #allocation5 [shape = 'u8[98304]{0}', space=vmem, size = 0x18000, scoped, tag = 'input window, operand 3, single buffered']
    #allocation6 [shape = 's32[1]{0}', space=sflag, size = 0x4, scoped, tag = 'scoped memory for tpu_custom_call.1']
    #allocation7 [shape = 'u8[1536]{0}', space=vmem, size = 0x800, scoped, tag = 'input window, operand 4, single buffered']
    #allocation8 [shape = 'u8[32768]{0}', space=vmem, size = 0x8000, scoped, tag = 'input window, operand 6, single buffered']
    #allocation9 [shape = 's32[1]{0}', space=sflag, size = 0x4, scoped, tag = 'scoped memory for tpu_custom_call.1']
    #allocation10 [shape = 'u8[8192]{0}', space=vmem, size = 0x2000, scoped, tag = 'output window, operand 0, single buffered']
    #allocation11 [shape = 'u8[8192]{0}', space=vmem, size = 0x2000, scoped, tag = 'output window, operand 1, single buffered']
    #allocation12 [shape = 's32[1]{0}', space=sflag, size = 0x4, scoped, tag = 'scoped memory for tpu_custom_call.1']
    %15 = vsyncpa [#allocation3], 0
    %16 = vsyncpa [#allocation6], 0
    %17 = vsyncpa [#allocation9], 0
    %18 = vsyncpa [#allocation4], 0
    %19 = vsyncpa [#allocation12], 0
    // Predicated region
    $region2: #{tpu_custom_call.1} parent=1 // pred_check
      _
    $region3: #{tpu_custom_call.1} parent=1 // pred_check_branch
      %21 = sbr.rel (0) target = $region5
    $region4: #{tpu_custom_call.1} parent=1 // pred_region
      _
    $region5: #{tpu_custom_call.1} parent=1 // pred_fallthru
      _
    // Predicated region
    $region6: #{tpu_custom_call.1} parent=1 // pred_check
      _
    $region7: #{tpu_custom_call.1} parent=1 // pred_check_branch
      %23 = sbr.rel (0) target = $region9
    $region8: #{tpu_custom_call.1} parent=1 // pred_region
      %s25 = ssub.s32 256, 256
      %26 = vsyncadd [#allocation3], %s25
      %s27 = sshll.u32 [#allocation2], 4
      %s28 = int_to_ptr.vmem [resolvable:$true] %s27
      %33 = dma.hbm_to_vmem [thread:$0]  %s1, 256, %s28, [#allocation3], 128, 128, 8
    $region9: #{tpu_custom_call.1} parent=1 // pred_fallthru
      _
    // Predicated region
    $region10: #{tpu_custom_call.1} parent=1 // pred_check
      _
    $region11: #{tpu_custom_call.1} parent=1 // pred_check_branch
      %35 = sbr.rel (0) target = $region13
    $region12: #{tpu_custom_call.1} parent=1 // pred_region
      _
    $region13: #{tpu_custom_call.1} parent=1 // pred_fallthru
      _
    // Predicated region
    $region14: #{tpu_custom_call.1} parent=1 // pred_check
      _
    $region15: #{tpu_custom_call.1} parent=1 // pred_check_branch
      %37 = sbr.rel (0) target = $region17
    $region16: #{tpu_custom_call.1} parent=1 // pred_region
      %s39 = ssub.s32 3072, 3072
      %40 = vsyncadd [#allocation6], %s39
      %s41 = sshll.u32 [#allocation5], 4
      %s42 = int_to_ptr.vmem [resolvable:$true] %s41
      %47 = dma.hbm_to_vmem [thread:$0]  %s3, 3072, %s42, [#allocation6], 192, 192, 12
    $region17: #{tpu_custom_call.1} parent=1 // pred_fallthru
      _
    // Predicated region
    $region18: #{tpu_custom_call.1} parent=1 // pred_check
      _
    $region19: #{tpu_custom_call.1} parent=1 // pred_check_branch
      %49 = sbr.rel (0) target = $region21
    $region20: #{tpu_custom_call.1} parent=1 // pred_region
      %s51 = ssub.s32 48, 48
      %52 = vsyncadd [#allocation6], %s51
      %s54 = sshll.u32 [#allocation7], 4
      %s55 = int_to_ptr.vmem [resolvable:$true] %s54
      %57 = dma.hbm_to_vmem [thread:$0]  %s4, 48, %s55, [#allocation6]
    $region21: #{tpu_custom_call.1} parent=1 // pred_fallthru
      _
    // Predicated region
    $region22: #{tpu_custom_call.1} parent=1 // pred_check
      _
    $region23: #{tpu_custom_call.1} parent=1 // pred_check_branch
      %59 = sbr.rel (0) target = $region25
    $region24: #{tpu_custom_call.1} parent=1 // pred_region
      _
    $region25: #{tpu_custom_call.1} parent=1 // pred_fallthru
      _
    // Predicated region
    $region26: #{tpu_custom_call.1} parent=1 // pred_check
      _
    $region27: #{tpu_custom_call.1} parent=1 // pred_check_branch
      %61 = sbr.rel (0) target = $region29
    $region28: #{tpu_custom_call.1} parent=1 // pred_region
      %s63 = ssub.s32 1024, 1024
      %64 = vsyncadd [#allocation9], %s63
      %s65 = sshll.u32 [#allocation8], 4
      %s66 = int_to_ptr.vmem [resolvable:$true] %s65
      %71 = dma.hbm_to_vmem [thread:$0]  %s6, 1024, %s66, [#allocation9], 64, 64, 4
    $region29: #{tpu_custom_call.1} parent=1 // pred_fallthru
      _
    // Predicated region
    $region30: #{tpu_custom_call.1} parent=1 // pred_check
      _
    $region31: #{tpu_custom_call.1} parent=1 // pred_check_branch
      %73 = sbr.rel (0) target = $region33
    $region32: #{tpu_custom_call.1} parent=1 // pred_region
      _
    $region33: #{tpu_custom_call.1} parent=1 // pred_fallthru
      _
    // Predicated region
    $region34: #{tpu_custom_call.1} parent=1 // pred_check
      _
    $region35: #{tpu_custom_call.1} parent=1 // pred_check_branch
      %75 = sbr.rel (0) target = $region37
    $region36: #{tpu_custom_call.1} parent=1 // pred_region
      %76 = dma.done [#allocation3], 256
    $region37: #{tpu_custom_call.1} parent=1 // pred_fallthru
      _
    // Predicated region
    $region38: #{tpu_custom_call.1} parent=1 // pred_check
      _
    $region39: #{tpu_custom_call.1} parent=1 // pred_check_branch
      %78 = sbr.rel (0) target = $region41
    $region40: #{tpu_custom_call.1} parent=1 // pred_region
      %79 = dma.done [#allocation6], 3072
    $region41: #{tpu_custom_call.1} parent=1 // pred_fallthru
      _
    // Predicated region
    $region42: #{tpu_custom_call.1} parent=1 // pred_check
      _
    $region43: #{tpu_custom_call.1} parent=1 // pred_check_branch
      %81 = sbr.rel (0) target = $region45
    $region44: #{tpu_custom_call.1} parent=1 // pred_region
      %82 = dma.done [#allocation6], 48
    $region45: #{tpu_custom_call.1} parent=1 // pred_fallthru
      _
    // Predicated region
    $region46: #{tpu_custom_call.1} parent=1 // pred_check
      _
    $region47: #{tpu_custom_call.1} parent=1 // pred_check_branch
      %84 = sbr.rel (0) target = $region49
    $region48: #{tpu_custom_call.1} parent=1 // pred_region
      %85 = dma.done [#allocation9], 1024
    $region49: #{tpu_custom_call.1} parent=1 // pred_fallthru
      _
    %v87 = vld [vmem:[%s2] sm:$0xff]
    %v88 = vld [vmem:[%s2 + $0x8] sm:$0xf]
    %v89 = vld [vmem:[%s2 + $0xc] sm:$0xff]
    %v90 = vld [vmem:[%s2 + $0x14] sm:$0xf]
    %v91 = vld [vmem:[%s2 + $0x18] sm:$0xff]
    %v92 = vld [vmem:[%s2 + $0x20] sm:$0xf]
    %v93 = vld [vmem:[%s2 + $0x24] sm:$0xff]
    %v94 = vld [vmem:[%s2 + $0x2c] sm:$0xf]
    %v95 = vld [vmem:[#allocation5] sm:$0xff]
    %v96 = vld [vmem:[#allocation5 + $0x8] sm:$0xf]
    %v97 = vld [vmem:[#allocation5 + $0xc] sm:$0xff]
    %v98 = vld [vmem:[#allocation5 + $0x14] sm:$0xf]
    %v99 = vld [vmem:[#allocation5 + $0x18] sm:$0xff]
    %v100 = vld [vmem:[#allocation5 + $0x20] sm:$0xf]
    %v101 = vld [vmem:[#allocation5 + $0x24] sm:$0xff]
    %v102 = vld [vmem:[#allocation5 + $0x2c] sm:$0xf]
    %v103 = vld [vmem:[#allocation5 + $0x30] sm:$0xff]
    %v104 = vld [vmem:[#allocation5 + $0x38] sm:$0xf]
    %v105 = vld [vmem:[#allocation5 + $0x3c] sm:$0xff]
    %v106 = vld [vmem:[#allocation5 + $0x44] sm:$0xf]
    %v107 = vld [vmem:[#allocation5 + $0x48] sm:$0xff]
    %v108 = vld [vmem:[#allocation5 + $0x50] sm:$0xf]
    %v109 = vld [vmem:[#allocation5 + $0x54] sm:$0xff]
    %v110 = vld [vmem:[#allocation5 + $0x5c] sm:$0xf]
    %v111 = vld [vmem:[#allocation5 + $0x60] sm:$0xff]
    %v112 = vld [vmem:[#allocation5 + $0x68] sm:$0xf]
    %v113 = vld [vmem:[#allocation5 + $0x6c] sm:$0xff]
    %v114 = vld [vmem:[#allocation5 + $0x74] sm:$0xf]
    %v115 = vld [vmem:[#allocation5 + $0x78] sm:$0xff]
    %v116 = vld [vmem:[#allocation5 + $0x80] sm:$0xf]
    %v117 = vld [vmem:[#allocation5 + $0x84] sm:$0xff]
    %v118 = vld [vmem:[#allocation5 + $0x8c] sm:$0xf]
    %v119 = vld [vmem:[#allocation5 + $0x90] sm:$0xff]
    %v120 = vld [vmem:[#allocation5 + $0x98] sm:$0xf]
    %v121 = vld [vmem:[#allocation5 + $0x9c] sm:$0xff]
    %v122 = vld [vmem:[#allocation5 + $0xa4] sm:$0xf]
    %v123 = vld [vmem:[#allocation5 + $0xa8] sm:$0xff]
    %v124 = vld [vmem:[#allocation5 + $0xb0] sm:$0xf]
    %v125 = vld [vmem:[#allocation5 + $0xb4] sm:$0xff]
    %v126 = vld [vmem:[#allocation5 + $0xbc] sm:$0xf]
    %v127 = vld [vmem:[#allocation8] sm:$0xf]
    %v128 = vld [vmem:[#allocation8 + $0x4] sm:$0xf]
    %v129 = vld [vmem:[#allocation8 + $0x8] sm:$0xf]
    %v130 = vld [vmem:[#allocation8 + $0xc] sm:$0xf]
    %v131 = vld [vmem:[#allocation8 + $0x10] sm:$0xf]
    %v132 = vld [vmem:[#allocation8 + $0x14] sm:$0xf]
    %v133 = vld [vmem:[#allocation8 + $0x18] sm:$0xf]
    %v134 = vld [vmem:[#allocation8 + $0x1c] sm:$0xf]
    %v135 = vld [vmem:[#allocation8 + $0x20] sm:$0xf]
    %v136 = vld [vmem:[#allocation8 + $0x24] sm:$0xf]
    %v137 = vld [vmem:[#allocation8 + $0x28] sm:$0xf]
    %v138 = vld [vmem:[#allocation8 + $0x2c] sm:$0xf]
    %v139 = vld [vmem:[#allocation8 + $0x30] sm:$0xf]
    %v140 = vld [vmem:[#allocation8 + $0x34] sm:$0xf]
    %v141 = vld [vmem:[#allocation8 + $0x38] sm:$0xf]
    %v142 = vld [vmem:[#allocation8 + $0x3c] sm:$0xf]
    %v143 = vld [vmem:[#allocation7] sm:$0x7]
    %v144 = vld [vmem:[%s5] sm:$0x1]
    %v145 = vld [vmem:[%s7] sm:$0x1]
    %v146 = vlaneseq
    %v147 = vand.u32 %v146, 127
    %vm148 = vcmp.lt.s32.totalorder %v147, 64
    %v149 = vld [vmem:[%s0] sm:$0xf]
    %v150 = vld [vmem:[%s0 + $0x4] sm:$0xf]
    %v151 = vld [vmem:[#allocation2] sm:$0xff]
    %v152 = vld [vmem:[#allocation2 + $0x8] sm:$0xff]
    %v154 = vlaneseq
    %v155 = vshrl.u32 %v154, 7
    %v156 = vsub.s32 0, %v155
    %v157 = vrot.slane %v143, %v156
    %v158 = vlaneseq
    %v159 = vshrl.u32 %v158, 7
    %v160 = vsub.s32 1, %v159
    %v161 = vrot.slane %v143, %v160
    %v162 = vlaneseq
    %v163 = vshrl.u32 %v162, 7
    %v164 = vsub.s32 2, %v163
    %v165 = vrot.slane %v143, %v164
    %v171 = vunpack.c.l.b16 %v149
    %v172 = vunpack.c.l.b16 %v150
    %v173 = vpack.c.b16 %v172, %v171
    %v182 = vunpack.c.l.b16 %v87
    %v183 = vunpack.c.h.b16 %v87
    %v184 = vunpack.c.l.b16 %v88
    %v185 = vunpack.c.l.b16 %v89
    %v186 = vunpack.c.h.b16 %v89
    %v187 = vunpack.c.l.b16 %v90
    %v188 = vunpack.c.l.b16 %v91
    %v189 = vunpack.c.h.b16 %v91
    %v190 = vunpack.c.l.b16 %v92
    %v191 = vunpack.c.l.b16 %v93
    %v192 = vunpack.c.h.b16 %v93
    %v193 = vunpack.c.l.b16 %v94
    %v194 = vpack.c.b16 %v185, %v182
    %v195 = vpack.c.b16 %v186, %v183
    %v196 = vpack.c.b16 %v187, %v184
    %v197 = vpack.c.b16 %v191, %v188
    %v198 = vpack.c.b16 %v192, %v189
    %v199 = vpack.c.b16 %v193, %v190
    %vm206 = vcmask 261120
    %v208 = vsel %vm206, %v173, 0
    %210 = vmatprep.subr.bf16.mxu0 %v195
    %211 = vmatpush1.bf16.msra.mxu0 %v194
    %212 = vmatprep.subr.bf16.mxu0 %v198
    %213 = vmatpush1.bf16.msra.mxu0 %v197
    %214 = vmatprep.subr.bf16.mxu0 0
    %215 = vmatpush1.bf16.msra.mxu0 0
    %216 = vmatprep.subr.bf16.mxu0 0
    %217 = vmatpush1.bf16.msra.mxu0 0
    %218 = vmatprep.subr.bf16.mxu0 0
    %219 = vmatpush1.bf16.msra.mxu0 0
    %220 = vmatprep.subr.bf16.mxu0 0
    %221 = vmatpush1.bf16.msra.mxu0 0
    %222 = vmatprep.subr.bf16.mxu0 0
    %223 = vmatpush1.bf16.msra.mxu0 0
    %224 = vmatprep.subr.bf16.mxu0 0
    %225 = vmatpush1.bf16.msra.mxu0 0
    %226 = vmatprep.subr.bf16.mxu0 0
    %227 = vmatpush1.bf16.msra.mxu0 0
    %228 = vmatprep.subr.bf16.mxu0 0
    %229 = vmatpush1.bf16.msra.mxu0 0
    %230 = vmatprep.subr.bf16.mxu0 0
    %231 = vmatpush1.bf16.msra.mxu0 0
    %232 = vmatprep.subr.bf16.mxu0 0
    %233 = vmatpush1.bf16.msra.mxu0 0
    %234 = vmatprep.subr.bf16.mxu0 0
    %235 = vmatpush1.bf16.msra.mxu0 0
    %236 = vmatprep.subr.bf16.mxu0 0
    %237 = vmatpush1.bf16.msra.mxu0 0
    %238 = vmatprep.subr.bf16.mxu0 0
    %239 = vmatpush1.bf16.msra.mxu0 0
    %240 = vmatprep.subr.bf16.mxu0 0
    %241 = vmatpush1.bf16.msra.mxu0 0
    %242 = vmatprep.mubr.bf16.mxu0 0
    %243 = vmatmul.mubr.bf16.gmra.mrb[0].mxu0 %v208
    %v244 = vpop.f32.mrb[0].mxu0
    %v245 = vadd.f32 %v157, %v244
    %v246 = vpop.f32.mrb[0].mxu0
    %v247 = vadd.f32 %v161, %v246
    %v248 = vpop.f32.mrb[0].mxu0
    %v249 = vadd.f32 %v157, %v248
    %v250 = vpop.f32.mrb[0].mxu0
    %v251 = vadd.f32 %v161, %v250
    %252 = vdwg.mxu0
    %253 = vmatprep.subr.bf16.mxu0 0
    %254 = vmatpush1.bf16.msra.mxu0 %v196
    %255 = vmatprep.subr.bf16.mxu0 0
    %256 = vmatpush1.bf16.msra.mxu0 %v199
    %257 = vmatprep.subr.bf16.mxu0 0
    %258 = vmatpush1.bf16.msra.mxu0 0
    %259 = vmatprep.subr.bf16.mxu0 0
    %260 = vmatpush1.bf16.msra.mxu0 0
    %261 = vmatprep.subr.bf16.mxu0 0
    %262 = vmatpush1.bf16.msra.mxu0 0
    %263 = vmatprep.subr.bf16.mxu0 0
    %264 = vmatpush1.bf16.msra.mxu0 0
    %265 = vmatprep.subr.bf16.mxu0 0
    %266 = vmatpush1.bf16.msra.mxu0 0
    %267 = vmatprep.subr.bf16.mxu0 0
    %268 = vmatpush1.bf16.msra.mxu0 0
    %269 = vmatprep.subr.bf16.mxu0 0
    %270 = vmatpush1.bf16.msra.mxu0 0
    %271 = vmatprep.subr.bf16.mxu0 0
    %272 = vmatpush1.bf16.msra.mxu0 0
    %273 = vmatprep.subr.bf16.mxu0 0
    %274 = vmatpush1.bf16.msra.mxu0 0
    %275 = vmatprep.subr.bf16.mxu0 0
    %276 = vmatpush1.bf16.msra.mxu0 0
    %277 = vmatprep.subr.bf16.mxu0 0
    %278 = vmatpush1.bf16.msra.mxu0 0
    %279 = vmatprep.subr.bf16.mxu0 0
    %280 = vmatpush1.bf16.msra.mxu0 0
    %281 = vmatprep.subr.bf16.mxu0 0
    %282 = vmatpush1.bf16.msra.mxu0 0
    %283 = vmatprep.subr.bf16.mxu0 0
    %284 = vmatpush1.bf16.msra.mxu0 0
    %285 = vmatprep.mubr.bf16.mxu0 0
    %286 = vmatmul.mubr.bf16.gmra.mrb[0].mxu0 %v208
    %v287 = vpop.f32.mrb[0].mxu0
    %v288 = vadd.f32 %v165, %v287
    %v289 = vpop.f32.mrb[0].mxu0
    %v290 = vpop.f32.mrb[0].mxu0
    %v291 = vadd.f32 %v165, %v290
    %v292 = vpop.f32.mrb[0].mxu0
    %293 = vdwg.mxu0
    %v294 = vpack.c.bf16 %v152, %v151
    %v327 = vunpack.c.l.b16 %v95
    %v328 = vunpack.c.h.b16 %v95
    %v329 = vunpack.c.l.b16 %v96
    %v330 = vunpack.c.l.b16 %v97
    %v331 = vunpack.c.h.b16 %v97
    %v332 = vunpack.c.l.b16 %v98
    %v333 = vunpack.c.l.b16 %v99
    %v334 = vunpack.c.h.b16 %v99
    %v335 = vunpack.c.l.b16 %v100
    %v336 = vunpack.c.l.b16 %v101
    %v337 = vunpack.c.h.b16 %v101
    %v338 = vunpack.c.l.b16 %v102
    %v339 = vunpack.c.l.b16 %v103
    %v340 = vunpack.c.h.b16 %v103
    %v341 = vunpack.c.l.b16 %v104
    %v342 = vunpack.c.l.b16 %v105
    %v343 = vunpack.c.h.b16 %v105
    %v344 = vunpack.c.l.b16 %v106
    %v345 = vunpack.c.l.b16 %v107
    %v346 = vunpack.c.h.b16 %v107
    %v347 = vunpack.c.l.b16 %v108
    %v348 = vunpack.c.l.b16 %v109
    %v349 = vunpack.c.h.b16 %v109
    %v350 = vunpack.c.l.b16 %v110
    %v351 = vunpack.c.l.b16 %v111
    %v352 = vunpack.c.h.b16 %v111
    %v353 = vunpack.c.l.b16 %v112
    %v354 = vunpack.c.l.b16 %v113
    %v355 = vunpack.c.h.b16 %v113
    %v356 = vunpack.c.l.b16 %v114
    %v357 = vunpack.c.l.b16 %v115
    %v358 = vunpack.c.h.b16 %v115
    %v359 = vunpack.c.l.b16 %v116
    %v360 = vunpack.c.l.b16 %v117
    %v361 = vunpack.c.h.b16 %v117
    %v362 = vunpack.c.l.b16 %v118
    %v363 = vunpack.c.l.b16 %v119
    %v364 = vunpack.c.h.b16 %v119
    %v365 = vunpack.c.l.b16 %v120
    %v366 = vunpack.c.l.b16 %v121
    %v367 = vunpack.c.h.b16 %v121
    %v368 = vunpack.c.l.b16 %v122
    %v369 = vunpack.c.l.b16 %v123
    %v370 = vunpack.c.h.b16 %v123
    %v371 = vunpack.c.l.b16 %v124
    %v372 = vunpack.c.l.b16 %v125
    %v373 = vunpack.c.h.b16 %v125
    %v374 = vunpack.c.l.b16 %v126
    %v375 = vpack.c.b16 %v330, %v327
    %v376 = vpack.c.b16 %v331, %v328
    %v377 = vpack.c.b16 %v332, %v329
    %v378 = vpack.c.b16 %v336, %v333
    %v379 = vpack.c.b16 %v337, %v334
    %v380 = vpack.c.b16 %v338, %v335
    %v381 = vpack.c.b16 %v342, %v339
    %v382 = vpack.c.b16 %v343, %v340
    %v383 = vpack.c.b16 %v344, %v341
    %v384 = vpack.c.b16 %v348, %v345
    %v385 = vpack.c.b16 %v349, %v346
    %v386 = vpack.c.b16 %v350, %v347
    %v387 = vpack.c.b16 %v354, %v351
    %v388 = vpack.c.b16 %v355, %v352
    %v389 = vpack.c.b16 %v356, %v353
    %v390 = vpack.c.b16 %v360, %v357
    %v391 = vpack.c.b16 %v361, %v358
    %v392 = vpack.c.b16 %v362, %v359
    %v393 = vpack.c.b16 %v366, %v363
    %v394 = vpack.c.b16 %v367, %v364
    %v395 = vpack.c.b16 %v368, %v365
    %v396 = vpack.c.b16 %v372, %v369
    %v397 = vpack.c.b16 %v373, %v370
    %v398 = vpack.c.b16 %v374, %v371
    %423 = vmatprep.subr.bf16.mxu0 %v376
    %424 = vmatpush1.bf16.msra.mxu0 %v375
    %425 = vmatprep.subr.bf16.mxu0 %v379
    %426 = vmatpush1.bf16.msra.mxu0 %v378
    %427 = vmatprep.subr.bf16.mxu0 %v382
    %428 = vmatpush1.bf16.msra.mxu0 %v381
    %429 = vmatprep.subr.bf16.mxu0 %v385
    %430 = vmatpush1.bf16.msra.mxu0 %v384
    %431 = vmatprep.subr.bf16.mxu0 %v388
    %432 = vmatpush1.bf16.msra.mxu0 %v387
    %433 = vmatprep.subr.bf16.mxu0 %v391
    %434 = vmatpush1.bf16.msra.mxu0 %v390
    %435 = vmatprep.subr.bf16.mxu0 %v394
    %436 = vmatpush1.bf16.msra.mxu0 %v393
    %437 = vmatprep.subr.bf16.mxu0 %v397
    %438 = vmatpush1.bf16.msra.mxu0 %v396
    %439 = vmatprep.subr.bf16.mxu0 0
    %440 = vmatpush1.bf16.msra.mxu0 0
    %441 = vmatprep.subr.bf16.mxu0 0
    %442 = vmatpush1.bf16.msra.mxu0 0
    %443 = vmatprep.subr.bf16.mxu0 0
    %444 = vmatpush1.bf16.msra.mxu0 0
    %445 = vmatprep.subr.bf16.mxu0 0
    %446 = vmatpush1.bf16.msra.mxu0 0
    %447 = vmatprep.subr.bf16.mxu0 0
    %448 = vmatpush1.bf16.msra.mxu0 0
    %449 = vmatprep.subr.bf16.mxu0 0
    %450 = vmatpush1.bf16.msra.mxu0 0
    %451 = vmatprep.subr.bf16.mxu0 0
    %452 = vmatpush1.bf16.msra.mxu0 0
    %453 = vmatprep.subr.bf16.mxu0 0
    %454 = vmatpush1.bf16.msra.mxu0 0
    %455 = vmatprep.mubr.bf16.mxu0 0
    %456 = vmatmul.mubr.bf16.gmra.mrb[0].mxu0 %v294
    %v457 = vpop.f32.mrb[0].mxu0
    %v458 = vadd.f32 0.0, %v457
    %v459 = vpop.f32.mrb[0].mxu0
    %v460 = vadd.f32 0.0, %v459
    %v461 = vpop.f32.mrb[0].mxu0
    %v462 = vadd.f32 0.0, %v461
    %v463 = vpop.f32.mrb[0].mxu0
    %v464 = vadd.f32 0.0, %v463
    %465 = vdwg.mxu0
    %466 = vmatprep.subr.bf16.mxu0 0
    %467 = vmatpush1.bf16.msra.mxu0 %v377
    %468 = vmatprep.subr.bf16.mxu0 0
    %469 = vmatpush1.bf16.msra.mxu0 %v380
    %470 = vmatprep.subr.bf16.mxu0 0
    %471 = vmatpush1.bf16.msra.mxu0 %v383
    %472 = vmatprep.subr.bf16.mxu0 0
    %473 = vmatpush1.bf16.msra.mxu0 %v386
    %474 = vmatprep.subr.bf16.mxu0 0
    %475 = vmatpush1.bf16.msra.mxu0 %v389
    %476 = vmatprep.subr.bf16.mxu0 0
    %477 = vmatpush1.bf16.msra.mxu0 %v392
    %478 = vmatprep.subr.bf16.mxu0 0
    %479 = vmatpush1.bf16.msra.mxu0 %v395
    %480 = vmatprep.subr.bf16.mxu0 0
    %481 = vmatpush1.bf16.msra.mxu0 %v398
    %482 = vmatprep.subr.bf16.mxu0 0
    %483 = vmatpush1.bf16.msra.mxu0 0
    %484 = vmatprep.subr.bf16.mxu0 0
    %485 = vmatpush1.bf16.msra.mxu0 0
    %486 = vmatprep.subr.bf16.mxu0 0
    %487 = vmatpush1.bf16.msra.mxu0 0
    %488 = vmatprep.subr.bf16.mxu0 0
    %489 = vmatpush1.bf16.msra.mxu0 0
    %490 = vmatprep.subr.bf16.mxu0 0
    %491 = vmatpush1.bf16.msra.mxu0 0
    %492 = vmatprep.subr.bf16.mxu0 0
    %493 = vmatpush1.bf16.msra.mxu0 0
    %494 = vmatprep.subr.bf16.mxu0 0
    %495 = vmatpush1.bf16.msra.mxu0 0
    %496 = vmatprep.subr.bf16.mxu0 0
    %497 = vmatpush1.bf16.msra.mxu0 0
    %498 = vmatprep.mubr.bf16.mxu0 0
    %499 = vmatmul.mubr.bf16.gmra.mrb[0].mxu0 %v294
    %v500 = vpop.f32.mrb[0].mxu0
    %v501 = vadd.f32 0.0, %v500
    %v502 = vpop.f32.mrb[0].mxu0
    %v503 = vpop.f32.mrb[0].mxu0
    %v504 = vadd.f32 0.0, %v503
    %v505 = vpop.f32.mrb[0].mxu0
    %506 = vdwg.mxu0
    %v507 = vadd.f32 %v245, %v458
    %v508 = vadd.f32 %v249, %v462
    %v509 = vxor.u32 %v507, 2147483648
    %v510 = vxor.u32 %v508, 2147483648
    %v511 = vmul.f32 %v509, 1.442695
    %v512 = vpow.pop %v511
    %v513 = vmul.f32 %v510, 1.442695
    %v514 = vpow.pop %v513
    %v515 = vadd.f32 %v512, 1.0
    %v516 = vadd.f32 %v514, 1.0
    %v517 = vrcp.pop %v515
    %v518 = vmul.f32 1.0, %v517
    %v519 = vrcp.pop %v516
    %v520 = vmul.f32 1.0, %v519
    %v521 = vadd.f32 %v247, %v460
    %v522 = vadd.f32 %v251, %v464
    %v523 = vxor.u32 %v521, 2147483648
    %v524 = vxor.u32 %v522, 2147483648
    %v525 = vmul.f32 %v523, 1.442695
    %v526 = vpow.pop %v525
    %v527 = vmul.f32 %v524, 1.442695
    %v528 = vpow.pop %v527
    %v529 = vadd.f32 %v526, 1.0
    %v530 = vadd.f32 %v528, 1.0
    %v531 = vrcp.pop %v529
    %v532 = vmul.f32 1.0, %v531
    %v533 = vrcp.pop %v530
    %v534 = vmul.f32 1.0, %v533
    %v536 = vlaneseq
    %v537 = vshrl.u32 %v536, 7
    %v538 = vsub.s32 0, %v537
    %v539 = vrot.slane %v144, %v538
    %v541 = vadd.f32 %v501, %v539
    %v542 = vadd.f32 %v504, %v539
    %v543 = vmul.f32 %v518, %v541
    %v544 = vmul.f32 %v520, %v542
    %v545 = vadd.f32 %v288, %v543
    %v546 = vadd.f32 %v291, %v544
    %v547 = vtanh.pop %v545
    %v548 = vtanh.pop %v546
    %v549 = vsub.f32 1.0, %v532
    %v550 = vsub.f32 1.0, %v534
    %v551 = vmul.f32 %v549, %v547
    %v552 = vmul.f32 %v550, %v548
    %v553 = vmul.f32 %v532, %v151
    %v554 = vmul.f32 %v534, %v152
    %v555 = vadd.f32 %v551, %v553
    %v556 = vadd.f32 %v552, %v554
    %v557 = vsel %vm148, %v555, 0.0
    %v558 = vsel %vm148, %v556, 0.0
    %559 = vst [vmem:[#allocation11] sm:$0xff] %v557
    %560 = vst [vmem:[#allocation11 + $0x8] sm:$0xff] %v558
    %v561 = vpack.c.bf16 %v558, %v557
    %v563 = vlaneseq
    %v564 = vshrl.u32 %v563, 7
    %v565 = vsub.s32 0, %v564
    %v566 = vrot.slane %v145, %v565
    %v584 = vunpack.c.l.b16 %v127
    %v585 = vunpack.c.l.b16 %v128
    %v586 = vunpack.c.l.b16 %v129
    %v587 = vunpack.c.l.b16 %v130
    %v588 = vunpack.c.l.b16 %v131
    %v589 = vunpack.c.l.b16 %v132
    %v590 = vunpack.c.l.b16 %v133
    %v591 = vunpack.c.l.b16 %v134
    %v592 = vunpack.c.l.b16 %v135
    %v593 = vunpack.c.l.b16 %v136
    %v594 = vunpack.c.l.b16 %v137
    %v595 = vunpack.c.l.b16 %v138
    %v596 = vunpack.c.l.b16 %v139
    %v597 = vunpack.c.l.b16 %v140
    %v598 = vunpack.c.l.b16 %v141
    %v599 = vunpack.c.l.b16 %v142
    %v600 = vpack.c.b16 %v585, %v584
    %v601 = vpack.c.b16 %v587, %v586
    %v602 = vpack.c.b16 %v589, %v588
    %v603 = vpack.c.b16 %v591, %v590
    %v604 = vpack.c.b16 %v593, %v592
    %v605 = vpack.c.b16 %v595, %v594
    %v606 = vpack.c.b16 %v597, %v596
    %v607 = vpack.c.b16 %v599, %v598
    %616 = vmatprep.subr.bf16.mxu0 0
    %617 = vmatpush1.bf16.msra.mxu0 %v600
    %618 = vmatprep.subr.bf16.mxu0 0
    %619 = vmatpush1.bf16.msra.mxu0 %v601
    %620 = vmatprep.subr.bf16.mxu0 0
    %621 = vmatpush1.bf16.msra.mxu0 %v602
    %622 = vmatprep.subr.bf16.mxu0 0
    %623 = vmatpush1.bf16.msra.mxu0 %v603
    %624 = vmatprep.subr.bf16.mxu0 0
    %625 = vmatpush1.bf16.msra.mxu0 %v604
    %626 = vmatprep.subr.bf16.mxu0 0
    %627 = vmatpush1.bf16.msra.mxu0 %v605
    %628 = vmatprep.subr.bf16.mxu0 0
    %629 = vmatpush1.bf16.msra.mxu0 %v606
    %630 = vmatprep.subr.bf16.mxu0 0
    %631 = vmatpush1.bf16.msra.mxu0 %v607
    %632 = vmatprep.subr.bf16.mxu0 0
    %633 = vmatpush1.bf16.msra.mxu0 0
    %634 = vmatprep.subr.bf16.mxu0 0
    %635 = vmatpush1.bf16.msra.mxu0 0
    %636 = vmatprep.subr.bf16.mxu0 0
    %637 = vmatpush1.bf16.msra.mxu0 0
    %638 = vmatprep.subr.bf16.mxu0 0
    %639 = vmatpush1.bf16.msra.mxu0 0
    %640 = vmatprep.subr.bf16.mxu0 0
    %641 = vmatpush1.bf16.msra.mxu0 0
    %642 = vmatprep.subr.bf16.mxu0 0
    %643 = vmatpush1.bf16.msra.mxu0 0
    %644 = vmatprep.subr.bf16.mxu0 0
    %645 = vmatpush1.bf16.msra.mxu0 0
    %646 = vmatprep.subr.bf16.mxu0 0
    %647 = vmatpush1.bf16.msra.mxu0 0
    %648 = vmatprep.mubr.bf16.mxu0 0
    %649 = vmatmul.mubr.bf16.gmra.mrb[0].mxu0 %v561
    %v650 = vpop.f32.mrb[0].mxu0
    %v651 = vadd.f32 %v566, %v650
    %v652 = vpop.f32.mrb[0].mxu0
    %v653 = vpop.f32.mrb[0].mxu0
    %v654 = vadd.f32 %v566, %v653
    %v655 = vpop.f32.mrb[0].mxu0
    %656 = vdwg.mxu0
    %657 = vst [vmem:[#allocation10] sm:$0xff] %v651
    %658 = vst [vmem:[#allocation10 + $0x8] sm:$0xff] %v654
    // Predicated region
    $region50: #{tpu_custom_call.1} parent=1 // pred_check
      _
    $region51: #{tpu_custom_call.1} parent=1 // pred_check_branch
      %660 = sbr.rel (0) target = $region53
    $region52: #{tpu_custom_call.1} parent=1 // pred_region
      %s662 = ssub.s32 256, 256
      %663 = vsyncadd [#allocation4], %s662
      %s664 = sshll.u32 [#allocation10], 4
      %s665 = int_to_ptr.vmem [resolvable:$true] %s664
      %670 = dma.vmem_to_hbm [thread:$0]  %s665, 256, %s8, [#allocation4], 128, 128, 8
    $region53: #{tpu_custom_call.1} parent=1 // pred_fallthru
      _
    // Predicated region
    $region54: #{tpu_custom_call.1} parent=1 // pred_check
      _
    $region55: #{tpu_custom_call.1} parent=1 // pred_check_branch
      %672 = sbr.rel (0) target = $region57
    $region56: #{tpu_custom_call.1} parent=1 // pred_region
      %s674 = ssub.s32 256, 256
      %675 = vsyncadd [#allocation12], %s674
      %s676 = sshll.u32 [#allocation11], 4
      %s677 = int_to_ptr.vmem [resolvable:$true] %s676
      %682 = dma.vmem_to_hbm [thread:$0]  %s677, 256, %s9, [#allocation12], 128, 128, 8
    $region57: #{tpu_custom_call.1} parent=1 // pred_fallthru
      _
    // Predicated region
    $region58: #{tpu_custom_call.1} parent=1 // pred_check
      _
    $region59: #{tpu_custom_call.1} parent=1 // pred_check_branch
      %684 = sbr.rel (0) target = $region61
    $region60: #{tpu_custom_call.1} parent=1 // pred_region
      %685 = dma.done [#allocation4], 256
    $region61: #{tpu_custom_call.1} parent=1 // pred_fallthru
      _
    // Predicated region
    $region62: #{tpu_custom_call.1} parent=1 // pred_check
      _
    $region63: #{tpu_custom_call.1} parent=1 // pred_check_branch
      %687 = sbr.rel (0) target = $region65
    $region64: #{tpu_custom_call.1} parent=1 // pred_region
      %688 = dma.done [#allocation12], 256
    $region65: #{tpu_custom_call.1} parent=1 // pred_fallthru
      _
    %689 = vsyncpa [#allocation3], 1
    %690 = vsyncpa [#allocation6], 1
    %691 = vsyncpa [#allocation9], 1
    %692 = vsyncpa [#allocation4], 1
    %693 = vsyncpa [#allocation12], 1

</llo_original>
